<compile_context>
chip_gen: v5e
topology: v5e:2x2
jax: 0.10.0
libtpu: 0.0.40
codegen_flags: <defaults>
</compile_context>

<pallas_src>
import functools

import jax
import jax.numpy as jnp
from jax import lax
from jax.experimental import pallas as pl
from jax.experimental.pallas import tpu as pltpu

_VMEM_LIMIT = 32 * 1024 * 1024  # safe on v5e/v6e (128 MiB) and v7x (64 MiB)


def _round_up(x, m):
    return ((x + m - 1) // m) * m


# ---------------------------------------------------------------------------
# Pallas kernels
# ---------------------------------------------------------------------------

def _bidir_rnn_kernel(lens_ref, x_ref, wih_ref, whh_ref, b_ref, out_ref,
                      xp_ref, h_ref):
    """One bidirectional tanh-RNN layer. grid axis 0 = direction (0 fwd, 1 bwd).

    lens_ref: (B, 1)   int32    valid length per batch element
    x_ref:    (T*B, Din_pad)    time-major rows (row = t*B + b), lane-padded
    wih_ref:  (Din_pad, Hp)     W_ih^T for this direction (zero-padded)
    whh_ref:  (Hp, Hp)          W_hh^T for this direction (zero-padded)
    b_ref:    (1, Hp)           b_ih + b_hh (zero-padded)
    out_ref:  (T*B, Hp)         this direction's 128-lane slice of (T*B, 2*Hp)
    xp_ref:   (T*B, Hp)  VMEM   scratch: hoisted input projection
    h_ref:    (B, Hp)    VMEM   scratch: running hidden state
    """
    d = pl.program_id(0)
    B, Hp = h_ref.shape
    R = x_ref.shape[0]
    T = R // B

    # Hoisted input projection: ONE big MXU matmul instead of T tiny ones.
    xp_ref[...] = (jnp.dot(x_ref[...], wih_ref[...],
                           preferred_element_type=jnp.float32) + b_ref[...])

    h_ref[...] = jnp.zeros_like(h_ref)
    lens = lens_ref[...]              # (B, 1) int32, loaded once before the loop
    reverse = d == 1                  # backward direction walks t from T-1 to 0

    # Manual unrolling inside a plain fori_loop (LLO scheduler visibility).
    UNROLL = 4 if T % 4 == 0 else (2 if T % 2 == 0 else 1)

    def step(block, carry):
        for u in range(UNROLL):
            i = block * UNROLL + u
            t = jnp.where(reverse, T - 1 - i, i)
            r0 = pl.multiple_of(t * B, B)
            m = (t < lens).astype(jnp.float32)          # (B, 1) validity mask
            h_old = h_ref[...]
            pre = xp_ref[pl.ds(r0, B), :] + jnp.dot(
                h_old, whh_ref[...], preferred_element_type=jnp.float32)
            h_new = jnp.tanh(pre)
            h_upd = h_old + m * (h_new - h_old)         # freeze h past length
            h_ref[...] = h_upd
            out_ref[pl.ds(r0, B), :] = h_upd * m        # padded steps -> 0
        return carry

    lax.fori_loop(0, T // UNROLL, step, 0)


def _head_kernel(x_ref, w1_ref, b1_ref, w2_ref, b2_ref, mask_ref, out_ref):
    """relu(x @ W1 + b1) -> tanh(. @ W2 + b2) -> zero-mask padded rows."""
    h = jnp.dot(x_ref[...], w1_ref[...],
                preferred_element_type=jnp.float32) + b1_ref[...]
    h = jnp.maximum(h, 0.0)
    y = jnp.tanh(jnp.dot(h, w2_ref[...],
                         preferred_element_type=jnp.float32) + b2_ref[...])
    out_ref[...] = y * mask_ref[...]


# ---------------------------------------------------------------------------
# Pallas wrappers
# ---------------------------------------------------------------------------

def bidir_rnn_layer(x_rows, lens_b1, wih, whh, b, batch):
    """x_rows: (T*B, Din_pad) -> (T*B, 2*Hp); fwd in lanes [0:Hp), bwd in [Hp:2Hp)."""
    R, din_pad = x_rows.shape
    Hp = whh.shape[-1]
    return pl.pallas_call(
        _bidir_rnn_kernel,
        out_shape=jax.ShapeDtypeStruct((R, 2 * Hp), jnp.float32),
        grid=(2,),
        in_specs=[
            pl.BlockSpec((batch, 1), lambda d: (0, 0)),
            pl.BlockSpec((R, din_pad), lambda d: (0, 0)),
            pl.BlockSpec((None, din_pad, Hp), lambda d: (d, 0, 0)),
            pl.BlockSpec((None, Hp, Hp), lambda d: (d, 0, 0)),
            pl.BlockSpec((None, 1, Hp), lambda d: (d, 0, 0)),
        ],
        out_specs=pl.BlockSpec((R, Hp), lambda d: (0, d)),
        scratch_shapes=[pltpu.VMEM((R, Hp), jnp.float32),
                        pltpu.VMEM((batch, Hp), jnp.float32)],
        compiler_params=pltpu.CompilerParams(
            dimension_semantics=("parallel",),
            vmem_limit_bytes=_VMEM_LIMIT),
    )(lens_b1, x_rows, wih, whh, b)


def head(x_rows, mask_rows, w1p, b1p, w2p, b2p, row_tile=256):
    """(T*B, 2*Hp) rows -> (T*B, Cp); gridded over row tiles, weights resident."""
    R, dp = x_rows.shape
    lp = w1p.shape[1]
    cp = w2p.shape[1]
    tile = min(row_tile, _round_up(R, 8))
    Rp = _round_up(R, tile)
    if Rp != R:
        x_rows = jnp.pad(x_rows, ((0, Rp - R), (0, 0)))
        mask_rows = jnp.pad(mask_rows, ((0, Rp - R), (0, 0)))
    out = pl.pallas_call(
        _head_kernel,
        out_shape=jax.ShapeDtypeStruct((Rp, cp), jnp.float32),
        grid=(Rp // tile,),
        in_specs=[
            pl.BlockSpec((tile, dp), lambda i: (i, 0)),
            pl.BlockSpec((dp, lp), lambda i: (0, 0)),    # resident weights
            pl.BlockSpec((1, lp), lambda i: (0, 0)),
            pl.BlockSpec((lp, cp), lambda i: (0, 0)),
            pl.BlockSpec((1, cp), lambda i: (0, 0)),
            pl.BlockSpec((tile, 1), lambda i: (i, 0)),
        ],
        out_specs=pl.BlockSpec((tile, cp), lambda i: (i, 0)),
        compiler_params=pltpu.CompilerParams(
            dimension_semantics=("parallel",),
            vmem_limit_bytes=_VMEM_LIMIT),
    )(x_rows, w1p, b1p, w2p, b2p, mask_rows)
    return out[:R]


# ---------------------------------------------------------------------------
# Forward pass
# ---------------------------------------------------------------------------

def wav2edge_forward(padded_params, x, input_lengths, n_landmarks):
    """x: (B, n_mel_channels, T); input_lengths: (B,) -> (B, n_landmarks, T)."""
    B, _, T = x.shape
    din_pad0 = padded_params["rnn"][0]["wih"].shape[1]

    # time-major rows: row index = t*B + b  (single transpose on the way in)
    x_rows = jnp.transpose(x, (2, 0, 1)).astype(jnp.float32).reshape(T * B, -1)
    x_rows = jnp.pad(x_rows, ((0, 0), (0, din_pad0 - x_rows.shape[1])))

    lens = input_lengths.astype(jnp.int32).reshape(B, 1)

    h = x_rows
    for layer in padded_params["rnn"]:
        h = bidir_rnn_layer(h, lens, layer["wih"], layer["whh"], layer["b"], B)

    mask_rows = (jnp.arange(T)[:, None] < input_lengths[None, :]).astype(
        jnp.float32).reshape(T * B, 1)
    y = head(h, mask_rows, padded_params["w1"], padded_params["b1"],
             padded_params["w2"], padded_params["b2"])

    y = y[:, :n_landmarks].reshape(T, B, n_landmarks)
    return jnp.transpose(y, (1, 2, 0))                  # (B, C, T)


# ---------------------------------------------------------------------------
# Parameters (PyTorch-shaped) + lane-padded packing
# ---------------------------------------------------------------------------

def init_params(key, opt):
    n_mel = opt["n_mel_channels"]
    hid = opt["rnn_hidden_dim"]
    H = hid // 2
    n_layers = opt["rnn_layers_num"]
    lin = opt["linear_dim"]
    C = opt["n_landmarks_channels"]

    def nrm(k, shape, scale=0.1):
        return scale * jax.random.normal(k, shape, dtype=jnp.float32)

    keys = jax.random.split(key, n_layers * 8 + 4)
    ki = iter(keys)
    rnn = []
    for l in range(n_layers):
        din = n_mel if l == 0 else hid
        rnn.append(dict(
            wih_f=nrm(next(ki), (H, din)), whh_f=nrm(next(ki), (H, H)),
            bih_f=nrm(next(ki), (H,)),     bhh_f=nrm(next(ki), (H,)),
            wih_b=nrm(next(ki), (H, din)), whh_b=nrm(next(ki), (H, H)),
            bih_b=nrm(next(ki), (H,)),     bhh_b=nrm(next(ki), (H,)),
        ))
    return dict(
        rnn=rnn,
        w1=nrm(next(ki), (lin, hid)), b1=nrm(next(ki), (lin,)),
        w2=nrm(next(ki), (C, lin)),   b2=nrm(next(ki), (C,)),
    )


def prepare_padded_params(params, opt):
    """Zero-pad all lane dims to multiples of 128 (exact: padded lanes stay 0)."""
    n_mel = opt["n_mel_channels"]
    H = opt["rnn_hidden_dim"] // 2
    Hp = _round_up(H, 128)
    lin = opt["linear_dim"]
    Lp = _round_up(lin, 128)
    C = opt["n_landmarks_channels"]
    Cp = _round_up(C, 128)

    rnn_padded = []
    for l, layer in enumerate(params["rnn"]):
        if l == 0:
            din_pad = _round_up(n_mel, 128)
            in_slices = [(0, slice(0, n_mel))]          # (dst row offset, src cols)
        else:
            din_pad = 2 * Hp
            in_slices = [(0, slice(0, H)), (Hp, slice(H, 2 * H))]
        wih = jnp.zeros((2, din_pad, Hp), jnp.float32)
        whh = jnp.zeros((2, Hp, Hp), jnp.float32)
        b = jnp.zeros((2, 1, Hp), jnp.float32)
        for d, sfx in enumerate(("f", "b")):
            w_ih = layer["wih_" + sfx]                  # (H, din)
            w_hh = layer["whh_" + sfx]                  # (H, H)
            bias = layer["bih_" + sfx] + layer["bhh_" + sfx]
            for off, sl in in_slices:
                blk = jnp.transpose(w_ih[:, sl])        # (n_rows, H)
                wih = wih.at[d, off:off + blk.shape[0], :H].set(blk)
            whh = whh.at[d, :H, :H].set(jnp.transpose(w_hh))
            b = b.at[d, 0, :H].set(bias)
        rnn_padded.append(dict(wih=wih, whh=whh, b=b))

    w1 = params["w1"]                                   # (lin, 2H)
    w1p = jnp.zeros((2 * Hp, Lp), jnp.float32)
    w1p = w1p.at[0:H, :lin].set(jnp.transpose(w1[:, 0:H]))
    w1p = w1p.at[Hp:Hp + H, :lin].set(jnp.transpose(w1[:, H:2 * H]))
    b1p = jnp.zeros((1, Lp), jnp.float32).at[0, :lin].set(params["b1"])
    w2 = params["w2"]                                   # (C, lin)
    w2p = jnp.zeros((Lp, Cp), jnp.float32).at[:lin, :C].set(jnp.transpose(w2))
    b2p = jnp.zeros((1, Cp), jnp.float32).at[0, :C].set(params["b2"])

    return dict(rnn=rnn_padded, w1=w1p, b1=b1p, w2=w2p, b2=b2p)


# ---------------------------------------------------------------------------
# Main
# ---------------------------------------------------------------------------

if __name__ == "__main__":
    opt = dict(
        n_mel_channels=32,
        rnn_hidden_dim=32,      # -> 16 per direction
        rnn_layers_num=2,       # must be even (assert in the torch module)
        linear_dim=32,
        n_landmarks_channels=16,
    )
    assert opt["rnn_layers_num"] % 2 == 0
    B, T = 2, 8

    key = jax.random.PRNGKey(0)
    k_param, k_x = jax.random.split(key)
    params = init_params(k_param, opt)
    padded = prepare_padded_params(params, opt)

    x = jax.random.normal(k_x, (B, opt["n_mel_channels"], T), dtype=jnp.float32)
    # pack_padded_sequence(enforce_sorted=True) expects descending lengths; max == T
    input_lengths = jnp.array([T, T - 2], dtype=jnp.int32)

    fwd = jax.jit(functools.partial(wav2edge_forward,
                                    n_landmarks=opt["n_landmarks_channels"]))
    out = fwd(padded, x, input_lengths)
    jax.block_until_ready(out)

    assert out.shape == (B, opt["n_landmarks_channels"], T), out.shape
    print("KERNEL_OK")
</pallas_src>

<mosaic_0001>
module attributes {stable_mosaic.version = 11 : i64} {
  func.func @_bidir_rnn_kernel(%arg0: i32, %arg1: memref<2x1xi32, #tpu.memory_space<vmem>>, %arg2: memref<16x128xf32, #tpu.memory_space<vmem>>, %arg3: memref<1x128x128xf32, #tpu.memory_space<vmem>>, %arg4: memref<1x128x128xf32, #tpu.memory_space<vmem>>, %arg5: memref<1x1x128xf32, #tpu.memory_space<vmem>>, %arg6: memref<16x128xf32, #tpu.memory_space<vmem>>, %arg7: memref<16x128xf32, #tpu.memory_space<vmem>>, %arg8: memref<2x128xf32, #tpu.memory_space<vmem>>) attributes {dimension_semantics = [#tpu.dimension_semantics<parallel>], iteration_bounds = array<i64: 2>, scalar_prefetch = 0 : i64, scratch_operands = 2 : i64, tpu.core_type = #tpu.core_type<tc>, window_params = [{pipeline_mode = #tpu.pipeline_mode<synchronous>, transform_indices = @transform_0, window_bounds = array<i64: 2, 1>}, {pipeline_mode = #tpu.pipeline_mode<synchronous>, transform_indices = @transform_1, window_bounds = array<i64: 16, 128>}, {transform_indices = @transform_2, window_bounds = array<i64: 1, 128, 128>}, {transform_indices = @transform_3, window_bounds = array<i64: 1, 128, 128>}, {transform_indices = @transform_4, window_bounds = array<i64: 1, 1, 128>}, {transform_indices = @transform_5, window_bounds = array<i64: 16, 128>}]} {
    %c0 = arith.constant 0 : index
    %c0_0 = arith.constant 0 : index
    %0 = vector.load %arg2[%c0, %c0_0] : memref<16x128xf32, #tpu.memory_space<vmem>>, vector<16x128xf32>
    %c0_1 = arith.constant 0 : index
    %c0_2 = arith.constant 0 : index
    %c0_3 = arith.constant 0 : index
    %1 = vector.load %arg3[%c0_1, %c0_2, %c0_3] : memref<1x128x128xf32, #tpu.memory_space<vmem>>, vector<1x128x128xf32>
    %2 = vector.shape_cast %1 : vector<1x128x128xf32> to vector<128x128xf32>
    %cst = arith.constant dense<0.000000e+00> : vector<16x128xf32>
    %3 = tpu.matmul %0, %2, %cst {dimension_numbers = #tpu.dot_dimension_numbers<[1], [0], [0], [1], [0, 0, 1, 1], [], []>} : vector<16x128xf32>, vector<128x128xf32>, vector<16x128xf32> -> vector<16x128xf32>
    %c0_4 = arith.constant 0 : index
    %c0_5 = arith.constant 0 : index
    %c0_6 = arith.constant 0 : index
    %4 = vector.load %arg5[%c0_4, %c0_5, %c0_6] : memref<1x1x128xf32, #tpu.memory_space<vmem>>, vector<1x1x128xf32>
    %5 = vector.shape_cast %4 : vector<1x1x128xf32> to vector<1x128xf32>
    %6 = vector.broadcast %5 : vector<1x128xf32> to vector<16x128xf32>
    %7 = arith.addf %3, %6 : vector<16x128xf32>
    %c0_7 = arith.constant 0 : index
    %c0_8 = arith.constant 0 : index
    %8 = vector.load %arg7[%c0_7, %c0_8] : memref<16x128xf32, #tpu.memory_space<vmem>>, vector<16x128xf32>
    tpu.vector_store %arg7[%c0_7, %c0_8], %7 {strides = array<i32>} : memref<16x128xf32, #tpu.memory_space<vmem>>, vector<16x128xf32>,
    %cst_9 = arith.constant 0.000000e+00 : f32
    %9 = vector.broadcast %cst_9 : f32 to vector<2x128xf32>
    %c0_10 = arith.constant 0 : index
    %c0_11 = arith.constant 0 : index
    %10 = vector.load %arg8[%c0_10, %c0_11] : memref<2x128xf32, #tpu.memory_space<vmem>>, vector<2x128xf32>
    tpu.vector_store %arg8[%c0_10, %c0_11], %9 {strides = array<i32>} : memref<2x128xf32, #tpu.memory_space<vmem>>, vector<2x128xf32>,
    %c0_12 = arith.constant 0 : index
    %c0_13 = arith.constant 0 : index
    %11 = vector.load %arg1[%c0_12, %c0_13] : memref<2x1xi32, #tpu.memory_space<vmem>>, vector<2x1xi32>
    %c1_i32 = arith.constant 1 : i32
    %12 = arith.cmpi eq, %arg0, %c1_i32 : i32
    %c0_i32 = arith.constant 0 : i32
    %c2_i32 = arith.constant 2 : i32
    %13 = arith.addi %c0_i32, %c2_i32 : i32
    %c1_i32_14 = arith.constant 1 : i32
    scf.for %arg9 = %c0_i32 to %13 step %c1_i32_14  : i32 {
      %c4_i32 = arith.constant 4 : i32
      %14 = arith.muli %arg9, %c4_i32 : i32
      %c0_i32_16 = arith.constant 0 : i32
      %15 = arith.addi %14, %c0_i32_16 : i32
      %c7_i32 = arith.constant 7 : i32
      %16 = arith.subi %c7_i32, %15 : i32
      %17 = arith.select %12, %16, %15 : i32
      %c2_i32_17 = arith.constant 2 : i32
      %18 = arith.muli %17, %c2_i32_17 : i32
      %19 = tpu.assume_multiple %18, 2 : i32
      %20 = vector.broadcast %17 : i32 to vector<2x1xi32>
      %21 = arith.cmpi slt, %20, %11 : vector<2x1xi32>
      %22 = arith.extui %21 : vector<2x1xi1> to vector<2x1xi32>
      %23 = arith.sitofp %22 : vector<2x1xi32> to vector<2x1xf32>
      %c0_18 = arith.constant 0 : index
      %c0_19 = arith.constant 0 : index
      %24 = vector.load %arg8[%c0_18, %c0_19] : memref<2x128xf32, #tpu.memory_space<vmem>>, vector<2x128xf32>
      %25 = arith.index_cast %19 : i32 to index
      %c0_20 = arith.constant 0 : index
      %26 = vector.load %arg7[%25, %c0_20] : memref<16x128xf32, #tpu.memory_space<vmem>>, vector<2x128xf32>
      %c0_21 = arith.constant 0 : index
      %c0_22 = arith.constant 0 : index
      %c0_23 = arith.constant 0 : index
      %27 = vector.load %arg4[%c0_21, %c0_22, %c0_23] : memref<1x128x128xf32, #tpu.memory_space<vmem>>, vector<1x128x128xf32>
      %28 = vector.shape_cast %27 : vector<1x128x128xf32> to vector<128x128xf32>
      %cst_24 = arith.constant dense<0.000000e+00> : vector<2x128xf32>
      %29 = tpu.matmul %24, %28, %cst_24 {dimension_numbers = #tpu.dot_dimension_numbers<[1], [0], [0], [1], [0, 0, 1, 1], [], []>} : vector<2x128xf32>, vector<128x128xf32>, vector<2x128xf32> -> vector<2x128xf32>
      %30 = arith.addf %26, %29 : vector<2x128xf32>
      %31 = math.tanh %30 : vector<2x128xf32>
      %32 = arith.subf %31, %24 : vector<2x128xf32>
      %33 = vector.broadcast %23 : vector<2x1xf32> to vector<2x128xf32>
      %34 = arith.mulf %33, %32 : vector<2x128xf32>
      %35 = arith.addf %24, %34 : vector<2x128xf32>
      %c0_25 = arith.constant 0 : index
      %c0_26 = arith.constant 0 : index
      %36 = vector.load %arg8[%c0_25, %c0_26] : memref<2x128xf32, #tpu.memory_space<vmem>>, vector<2x128xf32>
      tpu.vector_store %arg8[%c0_25, %c0_26], %35 {strides = array<i32>} : memref<2x128xf32, #tpu.memory_space<vmem>>, vector<2x128xf32>,
      %37 = vector.broadcast %23 : vector<2x1xf32> to vector<2x128xf32>
      %38 = arith.mulf %35, %37 : vector<2x128xf32>
      %39 = arith.index_cast %19 : i32 to index
      %c0_27 = arith.constant 0 : index
      %40 = vector.load %arg6[%39, %c0_27] : memref<16x128xf32, #tpu.memory_space<vmem>>, vector<2x128xf32>
      tpu.vector_store %arg6[%39, %c0_27], %38 {strides = array<i32>} : memref<16x128xf32, #tpu.memory_space<vmem>>, vector<2x128xf32>,
      %c4_i32_28 = arith.constant 4 : i32
      %41 = arith.muli %arg9, %c4_i32_28 : i32
      %c1_i32_29 = arith.constant 1 : i32
      %42 = arith.addi %41, %c1_i32_29 : i32
      %c7_i32_30 = arith.constant 7 : i32
      %43 = arith.subi %c7_i32_30, %42 : i32
      %44 = arith.select %12, %43, %42 : i32
      %c2_i32_31 = arith.constant 2 : i32
      %45 = arith.muli %44, %c2_i32_31 : i32
      %46 = tpu.assume_multiple %45, 2 : i32
      %47 = vector.broadcast %44 : i32 to vector<2x1xi32>
      %48 = arith.cmpi slt, %47, %11 : vector<2x1xi32>
      %49 = arith.extui %48 : vector<2x1xi1> to vector<2x1xi32>
      %50 = arith.sitofp %49 : vector<2x1xi32> to vector<2x1xf32>
      %c0_32 = arith.constant 0 : index
      %c0_33 = arith.constant 0 : index
      %51 = vector.load %arg8[%c0_32, %c0_33] : memref<2x128xf32, #tpu.memory_space<vmem>>, vector<2x128xf32>
      %52 = arith.index_cast %46 : i32 to index
      %c0_34 = arith.constant 0 : index
      %53 = vector.load %arg7[%52, %c0_34] : memref<16x128xf32, #tpu.memory_space<vmem>>, vector<2x128xf32>
      %c0_35 = arith.constant 0 : index
      %c0_36 = arith.constant 0 : index
      %c0_37 = arith.constant 0 : index
      %54 = vector.load %arg4[%c0_35, %c0_36, %c0_37] : memref<1x128x128xf32, #tpu.memory_space<vmem>>, vector<1x128x128xf32>
      %55 = vector.shape_cast %54 : vector<1x128x128xf32> to vector<128x128xf32>
      %cst_38 = arith.constant dense<0.000000e+00> : vector<2x128xf32>
      %56 = tpu.matmul %51, %55, %cst_38 {dimension_numbers = #tpu.dot_dimension_numbers<[1], [0], [0], [1], [0, 0, 1, 1], [], []>} : vector<2x128xf32>, vector<128x128xf32>, vector<2x128xf32> -> vector<2x128xf32>
      %57 = arith.addf %53, %56 : vector<2x128xf32>
      %58 = math.tanh %57 : vector<2x128xf32>
      %59 = arith.subf %58, %51 : vector<2x128xf32>
      %60 = vector.broadcast %50 : vector<2x1xf32> to vector<2x128xf32>
      %61 = arith.mulf %60, %59 : vector<2x128xf32>
      %62 = arith.addf %51, %61 : vector<2x128xf32>
      %c0_39 = arith.constant 0 : index
      %c0_40 = arith.constant 0 : index
      %63 = vector.load %arg8[%c0_39, %c0_40] : memref<2x128xf32, #tpu.memory_space<vmem>>, vector<2x128xf32>
      tpu.vector_store %arg8[%c0_39, %c0_40], %62 {strides = array<i32>} : memref<2x128xf32, #tpu.memory_space<vmem>>, vector<2x128xf32>,
      %64 = vector.broadcast %50 : vector<2x1xf32> to vector<2x128xf32>
      %65 = arith.mulf %62, %64 : vector<2x128xf32>
      %66 = arith.index_cast %46 : i32 to index
      %c0_41 = arith.constant 0 : index
      %67 = vector.load %arg6[%66, %c0_41] : memref<16x128xf32, #tpu.memory_space<vmem>>, vector<2x128xf32>
      tpu.vector_store %arg6[%66, %c0_41], %65 {strides = array<i32>} : memref<16x128xf32, #tpu.memory_space<vmem>>, vector<2x128xf32>,
      %c4_i32_42 = arith.constant 4 : i32
      %68 = arith.muli %arg9, %c4_i32_42 : i32
      %c2_i32_43 = arith.constant 2 : i32
      %69 = arith.addi %68, %c2_i32_43 : i32
      %c7_i32_44 = arith.constant 7 : i32
      %70 = arith.subi %c7_i32_44, %69 : i32
      %71 = arith.select %12, %70, %69 : i32
      %c2_i32_45 = arith.constant 2 : i32
      %72 = arith.muli %71, %c2_i32_45 : i32
      %73 = tpu.assume_multiple %72, 2 : i32
      %74 = vector.broadcast %71 : i32 to vector<2x1xi32>
      %75 = arith.cmpi slt, %74, %11 : vector<2x1xi32>
      %76 = arith.extui %75 : vector<2x1xi1> to vector<2x1xi32>
      %77 = arith.sitofp %76 : vector<2x1xi32> to vector<2x1xf32>
      %c0_46 = arith.constant 0 : index
      %c0_47 = arith.constant 0 : index
      %78 = vector.load %arg8[%c0_46, %c0_47] : memref<2x128xf32, #tpu.memory_space<vmem>>, vector<2x128xf32>
      %79 = arith.index_cast %73 : i32 to index
      %c0_48 = arith.constant 0 : index
      %80 = vector.load %arg7[%79, %c0_48] : memref<16x128xf32, #tpu.memory_space<vmem>>, vector<2x128xf32>
      %c0_49 = arith.constant 0 : index
      %c0_50 = arith.constant 0 : index
      %c0_51 = arith.constant 0 : index
      %81 = vector.load %arg4[%c0_49, %c0_50, %c0_51] : memref<1x128x128xf32, #tpu.memory_space<vmem>>, vector<1x128x128xf32>
      %82 = vector.shape_cast %81 : vector<1x128x128xf32> to vector<128x128xf32>
      %cst_52 = arith.constant dense<0.000000e+00> : vector<2x128xf32>
      %83 = tpu.matmul %78, %82, %cst_52 {dimension_numbers = #tpu.dot_dimension_numbers<[1], [0], [0], [1], [0, 0, 1, 1], [], []>} : vector<2x128xf32>, vector<128x128xf32>, vector<2x128xf32> -> vector<2x128xf32>
      %84 = arith.addf %80, %83 : vector<2x128xf32>
      %85 = math.tanh %84 : vector<2x128xf32>
      %86 = arith.subf %85, %78 : vector<2x128xf32>
      %87 = vector.broadcast %77 : vector<2x1xf32> to vector<2x128xf32>
      %88 = arith.mulf %87, %86 : vector<2x128xf32>
      %89 = arith.addf %78, %88 : vector<2x128xf32>
      %c0_53 = arith.constant 0 : index
      %c0_54 = arith.constant 0 : index
      %90 = vector.load %arg8[%c0_53, %c0_54] : memref<2x128xf32, #tpu.memory_space<vmem>>, vector<2x128xf32>
      tpu.vector_store %arg8[%c0_53, %c0_54], %89 {strides = array<i32>} : memref<2x128xf32, #tpu.memory_space<vmem>>, vector<2x128xf32>,
      %91 = vector.broadcast %77 : vector<2x1xf32> to vector<2x128xf32>
      %92 = arith.mulf %89, %91 : vector<2x128xf32>
      %93 = arith.index_cast %73 : i32 to index
      %c0_55 = arith.constant 0 : index
      %94 = vector.load %arg6[%93, %c0_55] : memref<16x128xf32, #tpu.memory_space<vmem>>, vector<2x128xf32>
      tpu.vector_store %arg6[%93, %c0_55], %92 {strides = array<i32>} : memref<16x128xf32, #tpu.memory_space<vmem>>, vector<2x128xf32>,
      %c4_i32_56 = arith.constant 4 : i32
      %95 = arith.muli %arg9, %c4_i32_56 : i32
      %c3_i32 = arith.constant 3 : i32
      %96 = arith.addi %95, %c3_i32 : i32
      %c7_i32_57 = arith.constant 7 : i32
      %97 = arith.subi %c7_i32_57, %96 : i32
      %98 = arith.select %12, %97, %96 : i32
      %c2_i32_58 = arith.constant 2 : i32
      %99 = arith.muli %98, %c2_i32_58 : i32
      %100 = tpu.assume_multiple %99, 2 : i32
      %101 = vector.broadcast %98 : i32 to vector<2x1xi32>
      %102 = arith.cmpi slt, %101, %11 : vector<2x1xi32>
      %103 = arith.extui %102 : vector<2x1xi1> to vector<2x1xi32>
      %104 = arith.sitofp %103 : vector<2x1xi32> to vector<2x1xf32>
      %c0_59 = arith.constant 0 : index
      %c0_60 = arith.constant 0 : index
      %105 = vector.load %arg8[%c0_59, %c0_60] : memref<2x128xf32, #tpu.memory_space<vmem>>, vector<2x128xf32>
      %106 = arith.index_cast %100 : i32 to index
      %c0_61 = arith.constant 0 : index
      %107 = vector.load %arg7[%106, %c0_61] : memref<16x128xf32, #tpu.memory_space<vmem>>, vector<2x128xf32>
      %c0_62 = arith.constant 0 : index
      %c0_63 = arith.constant 0 : index
      %c0_64 = arith.constant 0 : index
      %108 = vector.load %arg4[%c0_62, %c0_63, %c0_64] : memref<1x128x128xf32, #tpu.memory_space<vmem>>, vector<1x128x128xf32>
      %109 = vector.shape_cast %108 : vector<1x128x128xf32> to vector<128x128xf32>
      %cst_65 = arith.constant dense<0.000000e+00> : vector<2x128xf32>
      %110 = tpu.matmul %105, %109, %cst_65 {dimension_numbers = #tpu.dot_dimension_numbers<[1], [0], [0], [1], [0, 0, 1, 1], [], []>} : vector<2x128xf32>, vector<128x128xf32>, vector<2x128xf32> -> vector<2x128xf32>
      %111 = arith.addf %107, %110 : vector<2x128xf32>
      %112 = math.tanh %111 : vector<2x128xf32>
      %113 = arith.subf %112, %105 : vector<2x128xf32>
      %114 = vector.broadcast %104 : vector<2x1xf32> to vector<2x128xf32>
      %115 = arith.mulf %114, %113 : vector<2x128xf32>
      %116 = arith.addf %105, %115 : vector<2x128xf32>
      %c0_66 = arith.constant 0 : index
      %c0_67 = arith.constant 0 : index
      %117 = vector.load %arg8[%c0_66, %c0_67] : memref<2x128xf32, #tpu.memory_space<vmem>>, vector<2x128xf32>
      tpu.vector_store %arg8[%c0_66, %c0_67], %116 {strides = array<i32>} : memref<2x128xf32, #tpu.memory_space<vmem>>, vector<2x128xf32>,
      %118 = vector.broadcast %104 : vector<2x1xf32> to vector<2x128xf32>
      %119 = arith.mulf %116, %118 : vector<2x128xf32>
      %120 = arith.index_cast %100 : i32 to index
      %c0_68 = arith.constant 0 : index
      %121 = vector.load %arg6[%120, %c0_68] : memref<16x128xf32, #tpu.memory_space<vmem>>, vector<2x128xf32>
      tpu.vector_store %arg6[%120, %c0_68], %119 {strides = array<i32>} : memref<16x128xf32, #tpu.memory_space<vmem>>, vector<2x128xf32>,
    }
    %c2_i32_15 = arith.constant 2 : i32
    return
  }
  func.func @transform_0(%arg0: i32) -> (i32, i32) {
    %c0_i32 = arith.constant 0 : i32
    %c0_i32_0 = arith.constant 0 : i32
    %c0_i32_1 = arith.constant 0 : i32
    return %c0_i32, %c0_i32_0 : i32, i32
  }
  func.func @transform_1(%arg0: i32) -> (i32, i32) {
    %c0_i32 = arith.constant 0 : i32
    %c0_i32_0 = arith.constant 0 : i32
    %c0_i32_1 = arith.constant 0 : i32
    return %c0_i32, %c0_i32_0 : i32, i32
  }
  func.func @transform_2(%arg0: i32) -> (i32, i32, i32) {
    %c0_i32 = arith.constant 0 : i32
    %c0_i32_0 = arith.constant 0 : i32
    %c0_i32_1 = arith.constant 0 : i32
    return %arg0, %c0_i32, %c0_i32_0 : i32, i32, i32
  }
  func.func @transform_3(%arg0: i32) -> (i32, i32, i32) {
    %c0_i32 = arith.constant 0 : i32
    %c0_i32_0 = arith.constant 0 : i32
    %c0_i32_1 = arith.constant 0 : i32
    return %arg0, %c0_i32, %c0_i32_0 : i32, i32, i32
  }
  func.func @transform_4(%arg0: i32) -> (i32, i32, i32) {
    %c0_i32 = arith.constant 0 : i32
    %c0_i32_0 = arith.constant 0 : i32
    %c0_i32_1 = arith.constant 0 : i32
    return %arg0, %c0_i32, %c0_i32_0 : i32, i32, i32
  }
  func.func @transform_5(%arg0: i32) -> (i32, i32) {
    %c0_i32 = arith.constant 0 : i32
    %c0_i32_0 = arith.constant 0 : i32
    return %c0_i32, %arg0 : i32, i32
  }
}

module attributes {stable_mosaic.version = 11 : i64} {
  func.func @_bidir_rnn_kernel(%arg0: i32, %arg1: memref<2x1xi32, #tpu.memory_space<vmem>>, %arg2: memref<16x256xf32, #tpu.memory_space<vmem>>, %arg3: memref<1x256x128xf32, #tpu.memory_space<vmem>>, %arg4: memref<1x128x128xf32, #tpu.memory_space<vmem>>, %arg5: memref<1x1x128xf32, #tpu.memory_space<vmem>>, %arg6: memref<16x128xf32, #tpu.memory_space<vmem>>, %arg7: memref<16x128xf32, #tpu.memory_space<vmem>>, %arg8: memref<2x128xf32, #tpu.memory_space<vmem>>) attributes {dimension_semantics = [#tpu.dimension_semantics<parallel>], iteration_bounds = array<i64: 2>, scalar_prefetch = 0 : i64, scratch_operands = 2 : i64, tpu.core_type = #tpu.core_type<tc>, window_params = [{pipeline_mode = #tpu.pipeline_mode<synchronous>, transform_indices = @transform_0, window_bounds = array<i64: 2, 1>}, {pipeline_mode = #tpu.pipeline_mode<synchronous>, transform_indices = @transform_1, window_bounds = array<i64: 16, 256>}, {transform_indices = @transform_2, window_bounds = array<i64: 1, 256, 128>}, {transform_indices = @transform_3, window_bounds = array<i64: 1, 128, 128>}, {transform_indices = @transform_4, window_bounds = array<i64: 1, 1, 128>}, {transform_indices = @transform_5, window_bounds = array<i64: 16, 128>}]} {
    %c0 = arith.constant 0 : index
    %c0_0 = arith.constant 0 : index
    %0 = vector.load %arg2[%c0, %c0_0] : memref<16x256xf32, #tpu.memory_space<vmem>>, vector<16x256xf32>
    %c0_1 = arith.constant 0 : index
    %c0_2 = arith.constant 0 : index
    %c0_3 = arith.constant 0 : index
    %1 = vector.load %arg3[%c0_1, %c0_2, %c0_3] : memref<1x256x128xf32, #tpu.memory_space<vmem>>, vector<1x256x128xf32>
    %2 = vector.shape_cast %1 : vector<1x256x128xf32> to vector<256x128xf32>
    %cst = arith.constant dense<0.000000e+00> : vector<16x128xf32>
    %3 = tpu.matmul %0, %2, %cst {dimension_numbers = #tpu.dot_dimension_numbers<[1], [0], [0], [1], [0, 0, 1, 1], [], []>} : vector<16x256xf32>, vector<256x128xf32>, vector<16x128xf32> -> vector<16x128xf32>
    %c0_4 = arith.constant 0 : index
    %c0_5 = arith.constant 0 : index
    %c0_6 = arith.constant 0 : index
    %4 = vector.load %arg5[%c0_4, %c0_5, %c0_6] : memref<1x1x128xf32, #tpu.memory_space<vmem>>, vector<1x1x128xf32>
    %5 = vector.shape_cast %4 : vector<1x1x128xf32> to vector<1x128xf32>
    %6 = vector.broadcast %5 : vector<1x128xf32> to vector<16x128xf32>
    %7 = arith.addf %3, %6 : vector<16x128xf32>
    %c0_7 = arith.constant 0 : index
    %c0_8 = arith.constant 0 : index
    %8 = vector.load %arg7[%c0_7, %c0_8] : memref<16x128xf32, #tpu.memory_space<vmem>>, vector<16x128xf32>
    tpu.vector_store %arg7[%c0_7, %c0_8], %7 {strides = array<i32>} : memref<16x128xf32, #tpu.memory_space<vmem>>, vector<16x128xf32>,
    %cst_9 = arith.constant 0.000000e+00 : f32
    %9 = vector.broadcast %cst_9 : f32 to vector<2x128xf32>
    %c0_10 = arith.constant 0 : index
    %c0_11 = arith.constant 0 : index
    %10 = vector.load %arg8[%c0_10, %c0_11] : memref<2x128xf32, #tpu.memory_space<vmem>>, vector<2x128xf32>
    tpu.vector_store %arg8[%c0_10, %c0_11], %9 {strides = array<i32>} : memref<2x128xf32, #tpu.memory_space<vmem>>, vector<2x128xf32>,
    %c0_12 = arith.constant 0 : index
    %c0_13 = arith.constant 0 : index
    %11 = vector.load %arg1[%c0_12, %c0_13] : memref<2x1xi32, #tpu.memory_space<vmem>>, vector<2x1xi32>
    %c1_i32 = arith.constant 1 : i32
    %12 = arith.cmpi eq, %arg0, %c1_i32 : i32
    %c0_i32 = arith.constant 0 : i32
    %c2_i32 = arith.constant 2 : i32
    %13 = arith.addi %c0_i32, %c2_i32 : i32
    %c1_i32_14 = arith.constant 1 : i32
    scf.for %arg9 = %c0_i32 to %13 step %c1_i32_14  : i32 {
      %c4_i32 = arith.constant 4 : i32
      %14 = arith.muli %arg9, %c4_i32 : i32
      %c0_i32_16 = arith.constant 0 : i32
      %15 = arith.addi %14, %c0_i32_16 : i32
      %c7_i32 = arith.constant 7 : i32
      %16 = arith.subi %c7_i32, %15 : i32
      %17 = arith.select %12, %16, %15 : i32
      %c2_i32_17 = arith.constant 2 : i32
      %18 = arith.muli %17, %c2_i32_17 : i32
      %19 = tpu.assume_multiple %18, 2 : i32
      %20 = vector.broadcast %17 : i32 to vector<2x1xi32>
      %21 = arith.cmpi slt, %20, %11 : vector<2x1xi32>
      %22 = arith.extui %21 : vector<2x1xi1> to vector<2x1xi32>
      %23 = arith.sitofp %22 : vector<2x1xi32> to vector<2x1xf32>
      %c0_18 = arith.constant 0 : index
      %c0_19 = arith.constant 0 : index
      %24 = vector.load %arg8[%c0_18, %c0_19] : memref<2x128xf32, #tpu.memory_space<vmem>>, vector<2x128xf32>
      %25 = arith.index_cast %19 : i32 to index
      %c0_20 = arith.constant 0 : index
      %26 = vector.load %arg7[%25, %c0_20] : memref<16x128xf32, #tpu.memory_space<vmem>>, vector<2x128xf32>
      %c0_21 = arith.constant 0 : index
      %c0_22 = arith.constant 0 : index
      %c0_23 = arith.constant 0 : index
      %27 = vector.load %arg4[%c0_21, %c0_22, %c0_23] : memref<1x128x128xf32, #tpu.memory_space<vmem>>, vector<1x128x128xf32>
      %28 = vector.shape_cast %27 : vector<1x128x128xf32> to vector<128x128xf32>
      %cst_24 = arith.constant dense<0.000000e+00> : vector<2x128xf32>
      %29 = tpu.matmul %24, %28, %cst_24 {dimension_numbers = #tpu.dot_dimension_numbers<[1], [0], [0], [1], [0, 0, 1, 1], [], []>} : vector<2x128xf32>, vector<128x128xf32>, vector<2x128xf32> -> vector<2x128xf32>
      %30 = arith.addf %26, %29 : vector<2x128xf32>
      %31 = math.tanh %30 : vector<2x128xf32>
      %32 = arith.subf %31, %24 : vector<2x128xf32>
      %33 = vector.broadcast %23 : vector<2x1xf32> to vector<2x128xf32>
      %34 = arith.mulf %33, %32 : vector<2x128xf32>
      %35 = arith.addf %24, %34 : vector<2x128xf32>
      %c0_25 = arith.constant 0 : index
      %c0_26 = arith.constant 0 : index
      %36 = vector.load %arg8[%c0_25, %c0_26] : memref<2x128xf32, #tpu.memory_space<vmem>>, vector<2x128xf32>
      tpu.vector_store %arg8[%c0_25, %c0_26], %35 {strides = array<i32>} : memref<2x128xf32, #tpu.memory_space<vmem>>, vector<2x128xf32>,
      %37 = vector.broadcast %23 : vector<2x1xf32> to vector<2x128xf32>
      %38 = arith.mulf %35, %37 : vector<2x128xf32>
      %39 = arith.index_cast %19 : i32 to index
      %c0_27 = arith.constant 0 : index
      %40 = vector.load %arg6[%39, %c0_27] : memref<16x128xf32, #tpu.memory_space<vmem>>, vector<2x128xf32>
      tpu.vector_store %arg6[%39, %c0_27], %38 {strides = array<i32>} : memref<16x128xf32, #tpu.memory_space<vmem>>, vector<2x128xf32>,
      %c4_i32_28 = arith.constant 4 : i32
      %41 = arith.muli %arg9, %c4_i32_28 : i32
      %c1_i32_29 = arith.constant 1 : i32
      %42 = arith.addi %41, %c1_i32_29 : i32
      %c7_i32_30 = arith.constant 7 : i32
      %43 = arith.subi %c7_i32_30, %42 : i32
      %44 = arith.select %12, %43, %42 : i32
      %c2_i32_31 = arith.constant 2 : i32
      %45 = arith.muli %44, %c2_i32_31 : i32
      %46 = tpu.assume_multiple %45, 2 : i32
      %47 = vector.broadcast %44 : i32 to vector<2x1xi32>
      %48 = arith.cmpi slt, %47, %11 : vector<2x1xi32>
      %49 = arith.extui %48 : vector<2x1xi1> to vector<2x1xi32>
      %50 = arith.sitofp %49 : vector<2x1xi32> to vector<2x1xf32>
      %c0_32 = arith.constant 0 : index
      %c0_33 = arith.constant 0 : index
      %51 = vector.load %arg8[%c0_32, %c0_33] : memref<2x128xf32, #tpu.memory_space<vmem>>, vector<2x128xf32>
      %52 = arith.index_cast %46 : i32 to index
      %c0_34 = arith.constant 0 : index
      %53 = vector.load %arg7[%52, %c0_34] : memref<16x128xf32, #tpu.memory_space<vmem>>, vector<2x128xf32>
      %c0_35 = arith.constant 0 : index
      %c0_36 = arith.constant 0 : index
      %c0_37 = arith.constant 0 : index
      %54 = vector.load %arg4[%c0_35, %c0_36, %c0_37] : memref<1x128x128xf32, #tpu.memory_space<vmem>>, vector<1x128x128xf32>
      %55 = vector.shape_cast %54 : vector<1x128x128xf32> to vector<128x128xf32>
      %cst_38 = arith.constant dense<0.000000e+00> : vector<2x128xf32>
      %56 = tpu.matmul %51, %55, %cst_38 {dimension_numbers = #tpu.dot_dimension_numbers<[1], [0], [0], [1], [0, 0, 1, 1], [], []>} : vector<2x128xf32>, vector<128x128xf32>, vector<2x128xf32> -> vector<2x128xf32>
      %57 = arith.addf %53, %56 : vector<2x128xf32>
      %58 = math.tanh %57 : vector<2x128xf32>
      %59 = arith.subf %58, %51 : vector<2x128xf32>
      %60 = vector.broadcast %50 : vector<2x1xf32> to vector<2x128xf32>
      %61 = arith.mulf %60, %59 : vector<2x128xf32>
      %62 = arith.addf %51, %61 : vector<2x128xf32>
      %c0_39 = arith.constant 0 : index
      %c0_40 = arith.constant 0 : index
      %63 = vector.load %arg8[%c0_39, %c0_40] : memref<2x128xf32, #tpu.memory_space<vmem>>, vector<2x128xf32>
      tpu.vector_store %arg8[%c0_39, %c0_40], %62 {strides = array<i32>} : memref<2x128xf32, #tpu.memory_space<vmem>>, vector<2x128xf32>,
      %64 = vector.broadcast %50 : vector<2x1xf32> to vector<2x128xf32>
      %65 = arith.mulf %62, %64 : vector<2x128xf32>
      %66 = arith.index_cast %46 : i32 to index
      %c0_41 = arith.constant 0 : index
      %67 = vector.load %arg6[%66, %c0_41] : memref<16x128xf32, #tpu.memory_space<vmem>>, vector<2x128xf32>
      tpu.vector_store %arg6[%66, %c0_41], %65 {strides = array<i32>} : memref<16x128xf32, #tpu.memory_space<vmem>>, vector<2x128xf32>,
      %c4_i32_42 = arith.constant 4 : i32
      %68 = arith.muli %arg9, %c4_i32_42 : i32
      %c2_i32_43 = arith.constant 2 : i32
      %69 = arith.addi %68, %c2_i32_43 : i32
      %c7_i32_44 = arith.constant 7 : i32
      %70 = arith.subi %c7_i32_44, %69 : i32
      %71 = arith.select %12, %70, %69 : i32
      %c2_i32_45 = arith.constant 2 : i32
      %72 = arith.muli %71, %c2_i32_45 : i32
      %73 = tpu.assume_multiple %72, 2 : i32
      %74 = vector.broadcast %71 : i32 to vector<2x1xi32>
      %75 = arith.cmpi slt, %74, %11 : vector<2x1xi32>
      %76 = arith.extui %75 : vector<2x1xi1> to vector<2x1xi32>
      %77 = arith.sitofp %76 : vector<2x1xi32> to vector<2x1xf32>
      %c0_46 = arith.constant 0 : index
      %c0_47 = arith.constant 0 : index
      %78 = vector.load %arg8[%c0_46, %c0_47] : memref<2x128xf32, #tpu.memory_space<vmem>>, vector<2x128xf32>
      %79 = arith.index_cast %73 : i32 to index
      %c0_48 = arith.constant 0 : index
      %80 = vector.load %arg7[%79, %c0_48] : memref<16x128xf32, #tpu.memory_space<vmem>>, vector<2x128xf32>
      %c0_49 = arith.constant 0 : index
      %c0_50 = arith.constant 0 : index
      %c0_51 = arith.constant 0 : index
      %81 = vector.load %arg4[%c0_49, %c0_50, %c0_51] : memref<1x128x128xf32, #tpu.memory_space<vmem>>, vector<1x128x128xf32>
      %82 = vector.shape_cast %81 : vector<1x128x128xf32> to vector<128x128xf32>
      %cst_52 = arith.constant dense<0.000000e+00> : vector<2x128xf32>
      %83 = tpu.matmul %78, %82, %cst_52 {dimension_numbers = #tpu.dot_dimension_numbers<[1], [0], [0], [1], [0, 0, 1, 1], [], []>} : vector<2x128xf32>, vector<128x128xf32>, vector<2x128xf32> -> vector<2x128xf32>
      %84 = arith.addf %80, %83 : vector<2x128xf32>
      %85 = math.tanh %84 : vector<2x128xf32>
      %86 = arith.subf %85, %78 : vector<2x128xf32>
      %87 = vector.broadcast %77 : vector<2x1xf32> to vector<2x128xf32>
      %88 = arith.mulf %87, %86 : vector<2x128xf32>
      %89 = arith.addf %78, %88 : vector<2x128xf32>
      %c0_53 = arith.constant 0 : index
      %c0_54 = arith.constant 0 : index
      %90 = vector.load %arg8[%c0_53, %c0_54] : memref<2x128xf32, #tpu.memory_space<vmem>>, vector<2x128xf32>
      tpu.vector_store %arg8[%c0_53, %c0_54], %89 {strides = array<i32>} : memref<2x128xf32, #tpu.memory_space<vmem>>, vector<2x128xf32>,
      %91 = vector.broadcast %77 : vector<2x1xf32> to vector<2x128xf32>
      %92 = arith.mulf %89, %91 : vector<2x128xf32>
      %93 = arith.index_cast %73 : i32 to index
      %c0_55 = arith.constant 0 : index
      %94 = vector.load %arg6[%93, %c0_55] : memref<16x128xf32, #tpu.memory_space<vmem>>, vector<2x128xf32>
      tpu.vector_store %arg6[%93, %c0_55], %92 {strides = array<i32>} : memref<16x128xf32, #tpu.memory_space<vmem>>, vector<2x128xf32>,
      %c4_i32_56 = arith.constant 4 : i32
      %95 = arith.muli %arg9, %c4_i32_56 : i32
      %c3_i32 = arith.constant 3 : i32
      %96 = arith.addi %95, %c3_i32 : i32
      %c7_i32_57 = arith.constant 7 : i32
      %97 = arith.subi %c7_i32_57, %96 : i32
      %98 = arith.select %12, %97, %96 : i32
      %c2_i32_58 = arith.constant 2 : i32
      %99 = arith.muli %98, %c2_i32_58 : i32
      %100 = tpu.assume_multiple %99, 2 : i32
      %101 = vector.broadcast %98 : i32 to vector<2x1xi32>
      %102 = arith.cmpi slt, %101, %11 : vector<2x1xi32>
      %103 = arith.extui %102 : vector<2x1xi1> to vector<2x1xi32>
      %104 = arith.sitofp %103 : vector<2x1xi32> to vector<2x1xf32>
      %c0_59 = arith.constant 0 : index
      %c0_60 = arith.constant 0 : index
      %105 = vector.load %arg8[%c0_59, %c0_60] : memref<2x128xf32, #tpu.memory_space<vmem>>, vector<2x128xf32>
      %106 = arith.index_cast %100 : i32 to index
      %c0_61 = arith.constant 0 : index
      %107 = vector.load %arg7[%106, %c0_61] : memref<16x128xf32, #tpu.memory_space<vmem>>, vector<2x128xf32>
      %c0_62 = arith.constant 0 : index
      %c0_63 = arith.constant 0 : index
      %c0_64 = arith.constant 0 : index
      %108 = vector.load %arg4[%c0_62, %c0_63, %c0_64] : memref<1x128x128xf32, #tpu.memory_space<vmem>>, vector<1x128x128xf32>
      %109 = vector.shape_cast %108 : vector<1x128x128xf32> to vector<128x128xf32>
      %cst_65 = arith.constant dense<0.000000e+00> : vector<2x128xf32>
      %110 = tpu.matmul %105, %109, %cst_65 {dimension_numbers = #tpu.dot_dimension_numbers<[1], [0], [0], [1], [0, 0, 1, 1], [], []>} : vector<2x128xf32>, vector<128x128xf32>, vector<2x128xf32> -> vector<2x128xf32>
      %111 = arith.addf %107, %110 : vector<2x128xf32>
      %112 = math.tanh %111 : vector<2x128xf32>
      %113 = arith.subf %112, %105 : vector<2x128xf32>
      %114 = vector.broadcast %104 : vector<2x1xf32> to vector<2x128xf32>
      %115 = arith.mulf %114, %113 : vector<2x128xf32>
      %116 = arith.addf %105, %115 : vector<2x128xf32>
      %c0_66 = arith.constant 0 : index
      %c0_67 = arith.constant 0 : index
      %117 = vector.load %arg8[%c0_66, %c0_67] : memref<2x128xf32, #tpu.memory_space<vmem>>, vector<2x128xf32>
      tpu.vector_store %arg8[%c0_66, %c0_67], %116 {strides = array<i32>} : memref<2x128xf32, #tpu.memory_space<vmem>>, vector<2x128xf32>,
      %118 = vector.broadcast %104 : vector<2x1xf32> to vector<2x128xf32>
      %119 = arith.mulf %116, %118 : vector<2x128xf32>
      %120 = arith.index_cast %100 : i32 to index
      %c0_68 = arith.constant 0 : index
      %121 = vector.load %arg6[%120, %c0_68] : memref<16x128xf32, #tpu.memory_space<vmem>>, vector<2x128xf32>
      tpu.vector_store %arg6[%120, %c0_68], %119 {strides = array<i32>} : memref<16x128xf32, #tpu.memory_space<vmem>>, vector<2x128xf32>,
    }
    %c2_i32_15 = arith.constant 2 : i32
    return
  }
  func.func @transform_0(%arg0: i32) -> (i32, i32) {
    %c0_i32 = arith.constant 0 : i32
    %c0_i32_0 = arith.constant 0 : i32
    %c0_i32_1 = arith.constant 0 : i32
    return %c0_i32, %c0_i32_0 : i32, i32
  }
  func.func @transform_1(%arg0: i32) -> (i32, i32) {
    %c0_i32 = arith.constant 0 : i32
    %c0_i32_0 = arith.constant 0 : i32
    %c0_i32_1 = arith.constant 0 : i32
    return %c0_i32, %c0_i32_0 : i32, i32
  }
  func.func @transform_2(%arg0: i32) -> (i32, i32, i32) {
    %c0_i32 = arith.constant 0 : i32
    %c0_i32_0 = arith.constant 0 : i32
    %c0_i32_1 = arith.constant 0 : i32
    return %arg0, %c0_i32, %c0_i32_0 : i32, i32, i32
  }
  func.func @transform_3(%arg0: i32) -> (i32, i32, i32) {
    %c0_i32 = arith.constant 0 : i32
    %c0_i32_0 = arith.constant 0 : i32
    %c0_i32_1 = arith.constant 0 : i32
    return %arg0, %c0_i32, %c0_i32_0 : i32, i32, i32
  }
  func.func @transform_4(%arg0: i32) -> (i32, i32, i32) {
    %c0_i32 = arith.constant 0 : i32
    %c0_i32_0 = arith.constant 0 : i32
    %c0_i32_1 = arith.constant 0 : i32
    return %arg0, %c0_i32, %c0_i32_0 : i32, i32, i32
  }
  func.func @transform_5(%arg0: i32) -> (i32, i32) {
    %c0_i32 = arith.constant 0 : i32
    %c0_i32_0 = arith.constant 0 : i32
    return %c0_i32, %arg0 : i32, i32
  }
}

module attributes {stable_mosaic.version = 11 : i64} {
  func.func @_head_kernel(%arg0: i32, %arg1: memref<16x256xf32, #tpu.memory_space<vmem>>, %arg2: memref<256x128xf32, #tpu.memory_space<vmem>>, %arg3: memref<1x128xf32, #tpu.memory_space<vmem>>, %arg4: memref<128x128xf32, #tpu.memory_space<vmem>>, %arg5: memref<1x128xf32, #tpu.memory_space<vmem>>, %arg6: memref<16x1xf32, #tpu.memory_space<vmem>>, %arg7: memref<16x128xf32, #tpu.memory_space<vmem>>) attributes {dimension_semantics = [#tpu.dimension_semantics<parallel>], iteration_bounds = array<i64: 1>, scalar_prefetch = 0 : i64, scratch_operands = 0 : i64, tpu.core_type = #tpu.core_type<tc>, window_params = [{transform_indices = @transform_0, window_bounds = array<i64: 16, 256>}, {pipeline_mode = #tpu.pipeline_mode<synchronous>, transform_indices = @transform_1, window_bounds = array<i64: 256, 128>}, {pipeline_mode = #tpu.pipeline_mode<synchronous>, transform_indices = @transform_2, window_bounds = array<i64: 1, 128>}, {pipeline_mode = #tpu.pipeline_mode<synchronous>, transform_indices = @transform_3, window_bounds = array<i64: 128, 128>}, {pipeline_mode = #tpu.pipeline_mode<synchronous>, transform_indices = @transform_4, window_bounds = array<i64: 1, 128>}, {transform_indices = @transform_5, window_bounds = array<i64: 16, 1>}, {transform_indices = @transform_6, window_bounds = array<i64: 16, 128>}]} {
    %c0 = arith.constant 0 : index
    %c0_0 = arith.constant 0 : index
    %0 = vector.load %arg1[%c0, %c0_0] : memref<16x256xf32, #tpu.memory_space<vmem>>, vector<16x256xf32>
    %c0_1 = arith.constant 0 : index
    %c0_2 = arith.constant 0 : index
    %1 = vector.load %arg2[%c0_1, %c0_2] : memref<256x128xf32, #tpu.memory_space<vmem>>, vector<256x128xf32>
    %cst = arith.constant dense<0.000000e+00> : vector<16x128xf32>
    %2 = tpu.matmul %0, %1, %cst {dimension_numbers = #tpu.dot_dimension_numbers<[1], [0], [0], [1], [0, 0, 1, 1], [], []>} : vector<16x256xf32>, vector<256x128xf32>, vector<16x128xf32> -> vector<16x128xf32>
    %c0_3 = arith.constant 0 : index
    %c0_4 = arith.constant 0 : index
    %3 = vector.load %arg3[%c0_3, %c0_4] : memref<1x128xf32, #tpu.memory_space<vmem>>, vector<1x128xf32>
    %4 = vector.broadcast %3 : vector<1x128xf32> to vector<16x128xf32>
    %5 = arith.addf %2, %4 : vector<16x128xf32>
    %cst_5 = arith.constant 0.000000e+00 : f32
    %6 = vector.broadcast %cst_5 : f32 to vector<16x128xf32>
    %7 = arith.maximumf %5, %6 : vector<16x128xf32>
    %c0_6 = arith.constant 0 : index
    %c0_7 = arith.constant 0 : index
    %8 = vector.load %arg4[%c0_6, %c0_7] : memref<128x128xf32, #tpu.memory_space<vmem>>, vector<128x128xf32>
    %cst_8 = arith.constant dense<0.000000e+00> : vector<16x128xf32>
    %9 = tpu.matmul %7, %8, %cst_8 {dimension_numbers = #tpu.dot_dimension_numbers<[1], [0], [0], [1], [0, 0, 1, 1], [], []>} : vector<16x128xf32>, vector<128x128xf32>, vector<16x128xf32> -> vector<16x128xf32>
    %c0_9 = arith.constant 0 : index
    %c0_10 = arith.constant 0 : index
    %10 = vector.load %arg5[%c0_9, %c0_10] : memref<1x128xf32, #tpu.memory_space<vmem>>, vector<1x128xf32>
    %11 = vector.broadcast %10 : vector<1x128xf32> to vector<16x128xf32>
    %12 = arith.addf %9, %11 : vector<16x128xf32>
    %13 = math.tanh %12 : vector<16x128xf32>
    %c0_11 = arith.constant 0 : index
    %c0_12 = arith.constant 0 : index
    %14 = vector.load %arg6[%c0_11, %c0_12] : memref<16x1xf32, #tpu.memory_space<vmem>>, vector<16x1xf32>
    %15 = vector.broadcast %14 : vector<16x1xf32> to vector<16x128xf32>
    %16 = arith.mulf %13, %15 : vector<16x128xf32>
    %c0_13 = arith.constant 0 : index
    %c0_14 = arith.constant 0 : index
    %17 = vector.load %arg7[%c0_13, %c0_14] : memref<16x128xf32, #tpu.memory_space<vmem>>, vector<16x128xf32>
    tpu.vector_store %arg7[%c0_13, %c0_14], %16 {strides = array<i32>} : memref<16x128xf32, #tpu.memory_space<vmem>>, vector<16x128xf32>,
    return
  }
  func.func @transform_0(%arg0: i32) -> (i32, i32) {
    %c0_i32 = arith.constant 0 : i32
    %c0_i32_0 = arith.constant 0 : i32
    return %arg0, %c0_i32 : i32, i32
  }
  func.func @transform_1(%arg0: i32) -> (i32, i32) {
    %c0_i32 = arith.constant 0 : i32
    %c0_i32_0 = arith.constant 0 : i32
    %c0_i32_1 = arith.constant 0 : i32
    return %c0_i32, %c0_i32_0 : i32, i32
  }
  func.func @transform_2(%arg0: i32) -> (i32, i32) {
    %c0_i32 = arith.constant 0 : i32
    %c0_i32_0 = arith.constant 0 : i32
    %c0_i32_1 = arith.constant 0 : i32
    return %c0_i32, %c0_i32_0 : i32, i32
  }
  func.func @transform_3(%arg0: i32) -> (i32, i32) {
    %c0_i32 = arith.constant 0 : i32
    %c0_i32_0 = arith.constant 0 : i32
    %c0_i32_1 = arith.constant 0 : i32
    return %c0_i32, %c0_i32_0 : i32, i32
  }
  func.func @transform_4(%arg0: i32) -> (i32, i32) {
    %c0_i32 = arith.constant 0 : i32
    %c0_i32_0 = arith.constant 0 : i32
    %c0_i32_1 = arith.constant 0 : i32
    return %c0_i32, %c0_i32_0 : i32, i32
  }
  func.func @transform_5(%arg0: i32) -> (i32, i32) {
    %c0_i32 = arith.constant 0 : i32
    %c0_i32_0 = arith.constant 0 : i32
    return %arg0, %c0_i32 : i32, i32
  }
  func.func @transform_6(%arg0: i32) -> (i32, i32) {
    %c0_i32 = arith.constant 0 : i32
    %c0_i32_0 = arith.constant 0 : i32
    return %arg0, %c0_i32 : i32, i32
  }
}

</mosaic_0001>

<llo_original>
// kernel: wav2edge_forward.5
$region0: #{wav2edge_forward.5}
  #allocation0 [shape = 'u32[]', space=smem, size = 0x4, offset = 0x4, fixed_abs, tag = 'smem constant byte address 0x4 - core index']
  #allocation1 [shape = 'u32[72,128]{1,0:T(1,128)}', space=vmem, size = 0x9000, scoped, tag = 'internal scratch']
  %s0 = inlined_call_operand.vmem [shape: f32[16,256], index: 0, kind: input, shape index: {}]
  %s1 = inlined_call_operand.hbm [shape: f32[256,128], index: 1, kind: input, shape index: {}]
  %s2 = inlined_call_operand.vmem [shape: f32[1,128], index: 2, kind: input, shape index: {}]
  %s3 = inlined_call_operand.hbm [shape: f32[128,128], index: 3, kind: input, shape index: {}]
  %s4 = inlined_call_operand.vmem [shape: f32[1,128], index: 4, kind: input, shape index: {}]
  %s5 = inlined_call_operand.vmem [shape: f32[16,1], index: 5, kind: input, shape index: {}]
  %s6 = inlined_call_operand.vmem [shape: f32[16,128], index: 6, kind: output, shape index: {}]
  %s7 = sld [smem:[#allocation0]]
  $region42: #{wav2edge_forward.5} parent=0
    _
  %s9 = ssub.s32 1, %s7
  %s10 = scalar_select 0, %s9, %s7
  $region1: #{wav2edge_forward.5} parent=0
    #allocation2 [shape = 'u8[131072]{0}', space=vmem, size = 0x20000, scoped, tag = 'input window, operand 1, single buffered']
    #allocation3 [shape = 's32[1]{0}', space=sflag, size = 0x4, scoped, tag = 'scoped memory for wav2edge_forward.5']
    #allocation4 [shape = 'u8[65536]{0}', space=vmem, size = 0x10000, scoped, tag = 'input window, operand 3, single buffered']
    #allocation5 [shape = 's32[1]{0}', space=sflag, size = 0x4, scoped, tag = 'scoped memory for wav2edge_forward.5']
    %11 = vsyncpa [#allocation3], 0
    %12 = vsyncpa [#allocation5], 0
    // Predicated region
    $region2: #{wav2edge_forward.5} parent=1 // pred_check
      _
    $region3: #{wav2edge_forward.5} parent=1 // pred_check_branch
      %14 = sbr.rel (0) target = $region5
    $region4: #{wav2edge_forward.5} parent=1 // pred_region
      _
    $region5: #{wav2edge_forward.5} parent=1 // pred_fallthru
      _
    // Predicated region
    $region6: #{wav2edge_forward.5} parent=1 // pred_check
      _
    $region7: #{wav2edge_forward.5} parent=1 // pred_check_branch
      %16 = sbr.rel (0) target = $region9
    $region8: #{wav2edge_forward.5} parent=1 // pred_region
      %18 = vsyncadd [#allocation3], 0
      %s19 = sshll.u32 %s1, 4
      %s20 = int_to_ptr.hbm [resolvable:$true] %s19
      %s21 = sshll.u32 [#allocation2], 4
      %s22 = int_to_ptr.vmem [resolvable:$true] %s21
      %27 = dma.hbm_to_vmem [thread:$0]  %s20, 4096, %s22, [#allocation3], 128, 128, 8
    $region9: #{wav2edge_forward.5} parent=1 // pred_fallthru
      _
    // Predicated region
    $region10: #{wav2edge_forward.5} parent=1 // pred_check
      _
    $region11: #{wav2edge_forward.5} parent=1 // pred_check_branch
      %29 = sbr.rel (0) target = $region13
    $region12: #{wav2edge_forward.5} parent=1 // pred_region
      _
    $region13: #{wav2edge_forward.5} parent=1 // pred_fallthru
      _
    // Predicated region
    $region14: #{wav2edge_forward.5} parent=1 // pred_check
      _
    $region15: #{wav2edge_forward.5} parent=1 // pred_check_branch
      %31 = sbr.rel (0) target = $region17
    $region16: #{wav2edge_forward.5} parent=1 // pred_region
      %33 = vsyncadd [#allocation5], 0
      %s34 = sshll.u32 %s3, 4
      %s35 = int_to_ptr.hbm [resolvable:$true] %s34
      %s36 = sshll.u32 [#allocation4], 4
      %s37 = int_to_ptr.vmem [resolvable:$true] %s36
      %42 = dma.hbm_to_vmem [thread:$0]  %s35, 2048, %s37, [#allocation5], 128, 128, 8
    $region17: #{wav2edge_forward.5} parent=1 // pred_fallthru
      _
    // Predicated region
    $region18: #{wav2edge_forward.5} parent=1 // pred_check
      _
    $region19: #{wav2edge_forward.5} parent=1 // pred_check_branch
      %44 = sbr.rel (0) target = $region21
    $region20: #{wav2edge_forward.5} parent=1 // pred_region
      _
    $region21: #{wav2edge_forward.5} parent=1 // pred_fallthru
      _
    // Predicated region
    $region22: #{wav2edge_forward.5} parent=1 // pred_check
      _
    $region23: #{wav2edge_forward.5} parent=1 // pred_check_branch
      %46 = sbr.rel (0) target = $region25
    $region24: #{wav2edge_forward.5} parent=1 // pred_region
      _
    $region25: #{wav2edge_forward.5} parent=1 // pred_fallthru
      _
    // Predicated region
    $region26: #{wav2edge_forward.5} parent=1 // pred_check
      _
    $region27: #{wav2edge_forward.5} parent=1 // pred_check_branch
      %48 = sbr.rel (0) target = $region29
    $region28: #{wav2edge_forward.5} parent=1 // pred_region
      %50 = dma.done [#allocation3], 4096
    $region29: #{wav2edge_forward.5} parent=1 // pred_fallthru
      _
    // Predicated region
    $region30: #{wav2edge_forward.5} parent=1 // pred_check
      _
    $region31: #{wav2edge_forward.5} parent=1 // pred_check_branch
      %52 = sbr.rel (0) target = $region33
    $region32: #{wav2edge_forward.5} parent=1 // pred_region
      %54 = dma.done [#allocation5], 2048
    $region33: #{wav2edge_forward.5} parent=1 // pred_fallthru
      _
    %v55 = vld [vmem:[%s0] sm:$0xff]
    %v56 = vld [vmem:[%s0 + $0x8] sm:$0xff]
    %v57 = vld [vmem:[%s0 + $0x10] sm:$0xff]
    %v58 = vld [vmem:[%s0 + $0x18] sm:$0xff]
    %v59 = vld [vmem:[#allocation2] sm:$0xff]
    %v60 = vld [vmem:[#allocation2 + $0x8] sm:$0xff]
    %v61 = vld [vmem:[#allocation2 + $0x10] sm:$0xff]
    %v62 = vld [vmem:[#allocation2 + $0x18] sm:$0xff]
    %v63 = vld [vmem:[#allocation2 + $0x20] sm:$0xff]
    %v64 = vld [vmem:[#allocation2 + $0x28] sm:$0xff]
    %v65 = vld [vmem:[#allocation2 + $0x30] sm:$0xff]
    %v66 = vld [vmem:[#allocation2 + $0x38] sm:$0xff]
    %v67 = vld [vmem:[#allocation2 + $0x40] sm:$0xff]
    %v68 = vld [vmem:[#allocation2 + $0x48] sm:$0xff]
    %v69 = vld [vmem:[#allocation2 + $0x50] sm:$0xff]
    %v70 = vld [vmem:[#allocation2 + $0x58] sm:$0xff]
    %v71 = vld [vmem:[#allocation2 + $0x60] sm:$0xff]
    %v72 = vld [vmem:[#allocation2 + $0x68] sm:$0xff]
    %v73 = vld [vmem:[#allocation2 + $0x70] sm:$0xff]
    %v74 = vld [vmem:[#allocation2 + $0x78] sm:$0xff]
    %v75 = vld [vmem:[#allocation2 + $0x80] sm:$0xff]
    %v76 = vld [vmem:[#allocation2 + $0x88] sm:$0xff]
    %v77 = vld [vmem:[#allocation2 + $0x90] sm:$0xff]
    %v78 = vld [vmem:[#allocation2 + $0x98] sm:$0xff]
    %v79 = vld [vmem:[#allocation2 + $0xa0] sm:$0xff]
    %v80 = vld [vmem:[#allocation2 + $0xa8] sm:$0xff]
    %v81 = vld [vmem:[#allocation2 + $0xb0] sm:$0xff]
    %v82 = vld [vmem:[#allocation2 + $0xb8] sm:$0xff]
    %v83 = vld [vmem:[#allocation2 + $0xc0] sm:$0xff]
    %v84 = vld [vmem:[#allocation2 + $0xc8] sm:$0xff]
    %v85 = vld [vmem:[#allocation2 + $0xd0] sm:$0xff]
    %v86 = vld [vmem:[#allocation2 + $0xd8] sm:$0xff]
    %v87 = vld [vmem:[#allocation2 + $0xe0] sm:$0xff]
    %v88 = vld [vmem:[#allocation2 + $0xe8] sm:$0xff]
    %v89 = vld [vmem:[#allocation2 + $0xf0] sm:$0xff]
    %v90 = vld [vmem:[#allocation2 + $0xf8] sm:$0xff]
    %v91 = vld [vmem:[%s2] sm:$0x1]
    %v93 = vperm.slane %v91, 0
    %95 = vmatpush.msra.mxu0 %v74
    %96 = vmatpush.msra.mxu0 %v73
    %97 = vmatpush.msra.mxu0 %v72
    %98 = vmatpush.msra.mxu0 %v71
    %99 = vmatpush.msra.mxu0 %v70
    %100 = vmatpush.msra.mxu0 %v69
    %101 = vmatpush.msra.mxu0 %v68
    %102 = vmatpush.msra.mxu0 %v67
    %103 = vmatpush.msra.mxu0 %v66
    %104 = vmatpush.msra.mxu0 %v65
    %105 = vmatpush.msra.mxu0 %v64
    %106 = vmatpush.msra.mxu0 %v63
    %107 = vmatpush.msra.mxu0 %v62
    %108 = vmatpush.msra.mxu0 %v61
    %109 = vmatpush.msra.mxu0 %v60
    %110 = vmatpush.msra.mxu0 %v59
    %111 = vmatmul.f32.gmra.mxu0 %v55
    %v112 = vpop.f32.mrf.mxu0
    %v113 = vadd.f32 %v93, %v112
    %114 = vmatmul.f32.gmra.mxu0 %v57
    %v115 = vpop.f32.mrf.mxu0
    %v116 = vadd.f32 %v93, %v115
    %117 = vdwg.mxu0
    %118 = vmatpush.msra.mxu0 %v90
    %119 = vmatpush.msra.mxu0 %v89
    %120 = vmatpush.msra.mxu0 %v88
    %121 = vmatpush.msra.mxu0 %v87
    %122 = vmatpush.msra.mxu0 %v86
    %123 = vmatpush.msra.mxu0 %v85
    %124 = vmatpush.msra.mxu0 %v84
    %125 = vmatpush.msra.mxu0 %v83
    %126 = vmatpush.msra.mxu0 %v82
    %127 = vmatpush.msra.mxu0 %v81
    %128 = vmatpush.msra.mxu0 %v80
    %129 = vmatpush.msra.mxu0 %v79
    %130 = vmatpush.msra.mxu0 %v78
    %131 = vmatpush.msra.mxu0 %v77
    %132 = vmatpush.msra.mxu0 %v76
    %133 = vmatpush.msra.mxu0 %v75
    %134 = vmatmul.f32.gmra.mxu0 %v56
    %v135 = vpop.f32.mrf.mxu0
    %v136 = vadd.f32 %v113, %v135
    %137 = vmatmul.f32.gmra.mxu0 %v58
    %v138 = vpop.f32.mrf.mxu0
    %v139 = vadd.f32 %v116, %v138
    %140 = vdwg.mxu0
    %v141 = vmax.f32 %v136, 0.0
    %v142 = vmax.f32 %v139, 0.0
    %v143 = vld [vmem:[#allocation4] sm:$0xff]
    %v144 = vld [vmem:[#allocation4 + $0x8] sm:$0xff]
    %v145 = vld [vmem:[#allocation4 + $0x10] sm:$0xff]
    %v146 = vld [vmem:[#allocation4 + $0x18] sm:$0xff]
    %v147 = vld [vmem:[#allocation4 + $0x20] sm:$0xff]
    %v148 = vld [vmem:[#allocation4 + $0x28] sm:$0xff]
    %v149 = vld [vmem:[#allocation4 + $0x30] sm:$0xff]
    %v150 = vld [vmem:[#allocation4 + $0x38] sm:$0xff]
    %v151 = vld [vmem:[#allocation4 + $0x40] sm:$0xff]
    %v152 = vld [vmem:[#allocation4 + $0x48] sm:$0xff]
    %v153 = vld [vmem:[#allocation4 + $0x50] sm:$0xff]
    %v154 = vld [vmem:[#allocation4 + $0x58] sm:$0xff]
    %v155 = vld [vmem:[#allocation4 + $0x60] sm:$0xff]
    %v156 = vld [vmem:[#allocation4 + $0x68] sm:$0xff]
    %v157 = vld [vmem:[#allocation4 + $0x70] sm:$0xff]
    %v158 = vld [vmem:[#allocation4 + $0x78] sm:$0xff]
    %v159 = vld [vmem:[%s4] sm:$0x1]
    %v161 = vperm.slane %v159, 0
    %163 = vmatpush.msra.mxu0 %v158
    %164 = vmatpush.msra.mxu0 %v157
    %165 = vmatpush.msra.mxu0 %v156
    %166 = vmatpush.msra.mxu0 %v155
    %167 = vmatpush.msra.mxu0 %v154
    %168 = vmatpush.msra.mxu0 %v153
    %169 = vmatpush.msra.mxu0 %v152
    %170 = vmatpush.msra.mxu0 %v151
    %171 = vmatpush.msra.mxu0 %v150
    %172 = vmatpush.msra.mxu0 %v149
    %173 = vmatpush.msra.mxu0 %v148
    %174 = vmatpush.msra.mxu0 %v147
    %175 = vmatpush.msra.mxu0 %v146
    %176 = vmatpush.msra.mxu0 %v145
    %177 = vmatpush.msra.mxu0 %v144
    %178 = vmatpush.msra.mxu0 %v143
    %179 = vmatmul.f32.gmra.mxu0 %v141
    %v180 = vpop.f32.mrf.mxu0
    %v181 = vadd.f32 %v161, %v180
    %182 = vmatmul.f32.gmra.mxu0 %v142
    %v183 = vpop.f32.mrf.mxu0
    %v184 = vadd.f32 %v161, %v183
    %185 = vdwg.mxu0
    %v186 = vtanh.pop %v181
    %v187 = vtanh.pop %v184
    %v188 = vld [vmem:[%s5] sm:$0xff]
    %v189 = vld [vmem:[%s5 + $0x8] sm:$0xff]
    %191 = vset.pattern.permute.xlu0 0
    %192 = vperm.xlu0 %191, %v188
    %v193 = vpop.permute.xlu0 %192
    %196 = vset.pattern.permute.xlu0 0
    %197 = vperm.xlu0 %196, %v189
    %v198 = vpop.permute.xlu0 %197
    %v200 = vmul.f32 %v186, %v193
    %v201 = vmul.f32 %v187, %v198
    %202 = vst [vmem:[%s6] sm:$0xff] %v200
    %203 = vst [vmem:[%s6 + $0x8] sm:$0xff] %v201
    // Predicated region
    $region34: #{wav2edge_forward.5} parent=1 // pred_check
      _
    $region35: #{wav2edge_forward.5} parent=1 // pred_check_branch
      %205 = sbr.rel (0) target = $region37
    $region36: #{wav2edge_forward.5} parent=1 // pred_region
      _
    $region37: #{wav2edge_forward.5} parent=1 // pred_fallthru
      _
    // Predicated region
    $region38: #{wav2edge_forward.5} parent=1 // pred_check
      _
    $region39: #{wav2edge_forward.5} parent=1 // pred_check_branch
      %207 = sbr.rel (0) target = $region41
    $region40: #{wav2edge_forward.5} parent=1 // pred_region
      _
    $region41: #{wav2edge_forward.5} parent=1 // pred_fallthru
      _
    %208 = vsyncpa [#allocation3], 1
    %209 = vsyncpa [#allocation5], 1

// kernel: wav2edge_forward.3
$region0: #{wav2edge_forward.3}
  #allocation0 [shape = 'u32[]', space=smem, size = 0x4, offset = 0x4, fixed_abs, tag = 'smem constant byte address 0x4 - core index']
  #allocation1 [shape = 'u32[72,128]{1,0:T(1,128)}', space=vmem, size = 0x9000, scoped, tag = 'internal scratch']
  #allocation2 [shape = 'f32[16,128]{1,0:T(8,128)}', space=vmem, size = 0x2000, scoped, tag = 'scratch operand']
  #allocation3 [shape = 'f32[2,128]{1,0:T(2,128)}', space=vmem, size = 0x400, scoped, tag = 'scratch operand']
  %s0 = inlined_call_operand.vmem [shape: s32[2,1], index: 0, kind: input, shape index: {}]
  %s1 = inlined_call_operand.vmem [shape: f32[16,128], index: 1, kind: input, shape index: {}]
  %s2 = inlined_call_operand.hbm [shape: f32[2,128,128], index: 2, kind: input, shape index: {}]
  %s3 = inlined_call_operand.hbm [shape: f32[2,128,128], index: 3, kind: input, shape index: {}]
  %s4 = inlined_call_operand.vmem [shape: f32[2,1,128], index: 4, kind: input, shape index: {}]
  %s5 = inlined_call_operand.vmem [shape: f32[16,256], index: 5, kind: output, shape index: {}]
  %s6 = sld [smem:[#allocation0]]
  $region102: #{wav2edge_forward.3} parent=0
    _
  %s8 = ssub.s32 1, %s6
  %s9 = scalar_select 0, %s8, %s6
  $region1: #{wav2edge_forward.3} parent=0
    #allocation4 [shape = 'u8[131072]{0}', space=vmem, size = 0x20000, scoped, tag = 'input window, operand 2']
    #allocation5 [shape = 's32[2]{0}', space=sflag, size = 0x8, scoped, tag = 'scoped memory for wav2edge_forward.3']
    #allocation6 [shape = 'u8[131072]{0}', space=vmem, size = 0x20000, scoped, tag = 'input window, operand 3']
    #allocation7 [shape = 's32[2]{0}', space=sflag, size = 0x8, scoped, tag = 'scoped memory for wav2edge_forward.3']
    #allocation8 [shape = 'u8[16384]{0}', space=vmem, size = 0x4000, scoped, tag = 'output window, operand 0']
    %10 = vsyncpa [#allocation5], 0
    %s11 = scalar_lea.sflag [#allocation5], 1
    %12 = vsyncpa %s11, 0
    %13 = vsyncpa [#allocation7], 0
    %s14 = scalar_lea.sflag [#allocation7], 1
    %15 = vsyncpa %s14, 0
    loop: start=0, step=1, limit=4
    $region2: #{wav2edge_forward.3} parent=1 // loop_pre_header
      _
    $region3: #{wav2edge_forward.3} parent=1 // loop_header
      %s17 = sphi 0, %s21
      %p18 = scmp.ge.s32.totalorder %s17, 4
      %s25 = sphi 0, %s25
      %s27 = sphi 0, %s25
      %s28 = sphi 0, %s27
      %s42 = sphi 0, %s28
      %s46 = sphi 0, %s46
      %s48 = sphi 0, %s46
      %s49 = sphi 0, %s48
      %s63 = sphi 0, %s49
      %s69 = sphi 0, %s71
      %s72 = sphi 0, %s69
      %s73 = sphi 0, %s72
      %s89 = sphi 0, %s73
      %s95 = sphi 0, %s97
      %s98 = sphi 0, %s95
      %s99 = sphi 0, %s98
      %s115 = sphi 0, %s99
      %s121 = sphi 0, %s123
      %s124 = sphi 0, %s121
      %s125 = sphi 0, %s124
      %s141 = sphi 0, %s125
      %s147 = sphi 0, %s149
      %s150 = sphi 0, %s147
      %s151 = sphi 0, %s150
      %s167 = sphi 0, %s151
    $region4: #{wav2edge_forward.3} parent=1 // loop_header_branch
      %20 = sbr.rel (%p18) target = $region8
    $region5: #{wav2edge_forward.3} parent=1 // loop_body
      %s22 = ssub.s32 %s17, 1
      %s23 = ssub.s32 %s17, 2
      %s24 = sadd.s32 %s17, 1
      %s26 = sadd.s32 %s25, 1
      %p29 = scmp.eq.s32.totalorder %s17, 1
      %p30 = scmp.ne.s32.totalorder %s25, %s27
      %p31 = scmp.eq.s32.totalorder %s17, 0
      %p32 = por %p30, %p31
      %p33 = scmp.ne.s32.totalorder %s25, %s27
      %p34 = scmp.eq.s32.totalorder %s22, 1
      %p35 = por %p33, %p34
      %p36 = scmp.ne.s32.totalorder %s27, %s28
      %p37 = scmp.eq.s32.totalorder %s22, 0
      %p38 = por %p36, %p37
      %p39 = scmp.ne.s32.totalorder %s27, %s28
      %p40 = scmp.eq.s32.totalorder %s23, 1
      %p41 = por %p39, %p40
      %p43 = scmp.ne.s32.totalorder %s28, %s42
      %p44 = scmp.eq.s32.totalorder %s23, 0
      %p45 = por %p43, %p44
      %s47 = sadd.s32 %s46, 1
      %p50 = scmp.eq.s32.totalorder %s17, 1
      %p51 = scmp.ne.s32.totalorder %s46, %s48
      %p52 = scmp.eq.s32.totalorder %s17, 0
      %p53 = por %p51, %p52
      %p54 = scmp.ne.s32.totalorder %s46, %s48
      %p55 = scmp.eq.s32.totalorder %s22, 1
      %p56 = por %p54, %p55
      %p57 = scmp.ne.s32.totalorder %s48, %s49
      %p58 = scmp.eq.s32.totalorder %s22, 0
      %p59 = por %p57, %p58
      %p60 = scmp.ne.s32.totalorder %s48, %s49
      %p61 = scmp.eq.s32.totalorder %s23, 1
      %p62 = por %p60, %p61
      %p64 = scmp.ne.s32.totalorder %s49, %s63
      %p65 = scmp.eq.s32.totalorder %s23, 0
      %p66 = por %p64, %p65
      %s67 = ssub.s32 %s17, %s24
      %p68 = scmp.eq.s32.totalorder %s67, 0
      %s70 = sadd.s32 %s69, 1
      %s71 = scalar_select %p68, %s69, %s70
      %p74 = pneg %p68
      %p75 = scmp.eq.s32.totalorder %s17, 1
      %p76 = por %p74, %p75
      %p77 = scmp.ne.s32.totalorder %s69, %s72
      %p78 = scmp.eq.s32.totalorder %s17, 0
      %p79 = por %p77, %p78
      %p80 = scmp.ne.s32.totalorder %s69, %s72
      %p81 = scmp.eq.s32.totalorder %s22, 1
      %p82 = por %p80, %p81
      %p83 = scmp.ne.s32.totalorder %s72, %s73
      %p84 = scmp.eq.s32.totalorder %s22, 0
      %p85 = por %p83, %p84
      %p86 = scmp.ne.s32.totalorder %s72, %s73
      %p87 = scmp.eq.s32.totalorder %s23, 1
      %p88 = por %p86, %p87
      %p90 = scmp.ne.s32.totalorder %s73, %s89
      %p91 = scmp.eq.s32.totalorder %s23, 0
      %p92 = por %p90, %p91
      %s93 = ssub.s32 %s17, %s24
      %p94 = scmp.eq.s32.totalorder %s93, 0
      %s96 = sadd.s32 %s95, 1
      %s97 = scalar_select %p94, %s95, %s96
      %p100 = pneg %p94
      %p101 = scmp.eq.s32.totalorder %s17, 1
      %p102 = por %p100, %p101
      %p103 = scmp.ne.s32.totalorder %s95, %s98
      %p104 = scmp.eq.s32.totalorder %s17, 0
      %p105 = por %p103, %p104
      %p106 = scmp.ne.s32.totalorder %s95, %s98
      %p107 = scmp.eq.s32.totalorder %s22, 1
      %p108 = por %p106, %p107
      %p109 = scmp.ne.s32.totalorder %s98, %s99
      %p110 = scmp.eq.s32.totalorder %s22, 0
      %p111 = por %p109, %p110
      %p112 = scmp.ne.s32.totalorder %s98, %s99
      %p113 = scmp.eq.s32.totalorder %s23, 1
      %p114 = por %p112, %p113
      %p116 = scmp.ne.s32.totalorder %s99, %s115
      %p117 = scmp.eq.s32.totalorder %s23, 0
      %p118 = por %p116, %p117
      %s119 = ssub.s32 %s17, %s24
      %p120 = scmp.eq.s32.totalorder %s119, 0
      %s122 = sadd.s32 %s121, 1
      %s123 = scalar_select %p120, %s121, %s122
      %p126 = pneg %p120
      %p127 = scmp.eq.s32.totalorder %s17, 1
      %p128 = por %p126, %p127
      %p129 = scmp.ne.s32.totalorder %s121, %s124
      %p130 = scmp.eq.s32.totalorder %s17, 0
      %p131 = por %p129, %p130
      %p132 = scmp.ne.s32.totalorder %s121, %s124
      %p133 = scmp.eq.s32.totalorder %s22, 1
      %p134 = por %p132, %p133
      %p135 = scmp.ne.s32.totalorder %s124, %s125
      %p136 = scmp.eq.s32.totalorder %s22, 0
      %p137 = por %p135, %p136
      %p138 = scmp.ne.s32.totalorder %s124, %s125
      %p139 = scmp.eq.s32.totalorder %s23, 1
      %p140 = por %p138, %p139
      %p142 = scmp.ne.s32.totalorder %s125, %s141
      %p143 = scmp.eq.s32.totalorder %s23, 0
      %p144 = por %p142, %p143
      %s145 = ssub.s32 %s17, %s24
      %p146 = scmp.eq.s32.totalorder %s145, 0
      %s148 = sadd.s32 %s147, 1
      %s149 = scalar_select %p146, %s147, %s148
      %p152 = pneg %p146
      %p153 = scmp.eq.s32.totalorder %s17, 1
      %p154 = por %p152, %p153
      %p155 = scmp.ne.s32.totalorder %s147, %s150
      %p156 = scmp.eq.s32.totalorder %s17, 0
      %p157 = por %p155, %p156
      %p158 = scmp.ne.s32.totalorder %s147, %s150
      %p159 = scmp.eq.s32.totalorder %s22, 1
      %p160 = por %p158, %p159
      %p161 = scmp.ne.s32.totalorder %s150, %s151
      %p162 = scmp.eq.s32.totalorder %s22, 0
      %p163 = por %p161, %p162
      %p164 = scmp.ne.s32.totalorder %s150, %s151
      %p165 = scmp.eq.s32.totalorder %s23, 1
      %p166 = por %p164, %p165
      %p168 = scmp.ne.s32.totalorder %s151, %s167
      %p169 = scmp.eq.s32.totalorder %s23, 0
      %p170 = por %p168, %p169
      %p171 = scmp.le.s32.totalorder 1, %s17
      %p172 = scmp.lt.s32.totalorder %s17, 3
      %p173 = pnand %p171, %p172
      %p174 = pneg %p173
      // Predicated region
      $region9: #{wav2edge_forward.3} parent=5 // pred_check
        _
      $region10: #{wav2edge_forward.3} parent=5 // pred_check_branch
        %176 = sbr.rel (%p173) target = $region12
      $region11: #{wav2edge_forward.3} parent=5 // pred_region
        %s177 = ssub.s32 %s17, 1
        // Predicated region
        $region13: #{wav2edge_forward.3} parent=11 // pred_check
          %p178 = pneg %p38
        $region14: #{wav2edge_forward.3} parent=11 // pred_check_branch
          %180 = sbr.rel (%p178) target = $region16
        $region15: #{wav2edge_forward.3} parent=11 // pred_region
          _
        $region16: #{wav2edge_forward.3} parent=11 // pred_fallthru
          _
        // Predicated region
        $region17: #{wav2edge_forward.3} parent=11 // pred_check
          %p181 = pneg %p59
        $region18: #{wav2edge_forward.3} parent=11 // pred_check_branch
          %183 = sbr.rel (%p181) target = $region20
        $region19: #{wav2edge_forward.3} parent=11 // pred_region
          _
        $region20: #{wav2edge_forward.3} parent=11 // pred_fallthru
          _
      $region12: #{wav2edge_forward.3} parent=5 // pred_fallthru
        _
      %p184 = scmp.lt.s32.totalorder %s17, 2
      // Predicated region
      $region21: #{wav2edge_forward.3} parent=5 // pred_check
        %p185 = pneg %p184
      $region22: #{wav2edge_forward.3} parent=5 // pred_check_branch
        %187 = sbr.rel (%p185) target = $region24
      $region23: #{wav2edge_forward.3} parent=5 // pred_region
        // Predicated region
        $region25: #{wav2edge_forward.3} parent=23 // pred_check
          %p188 = pneg %p79
        $region26: #{wav2edge_forward.3} parent=23 // pred_check_branch
          %190 = sbr.rel (%p188) target = $region28
        $region27: #{wav2edge_forward.3} parent=23 // pred_region
          %s191 = sand.u32 %s69, 1
          %s192 = scalar_lea.sflag [#allocation5], %s191
          %s193 = sand.u32 %s69, 1
          %s194 = smul.addr %s193, 128
          %s195 = scalar_lea.vmem [#allocation4], %s194
          %197 = vsyncadd %s192, 0
          %s198 = smul.addr %s17, 16
          %s199 = smul.addr %s198, 8
          %s200 = scalar_lea.hbm %s2, %s199
          %s201 = sshll.u32 %s200, 4
          %s202 = int_to_ptr.hbm [resolvable:$true] %s201
          %s203 = sshll.u32 %s195, 4
          %s204 = int_to_ptr.vmem [resolvable:$true] %s203
          %209 = dma.hbm_to_vmem [thread:$0]  %s202, 2048, %s204, %s192, 128, 128, 8
        $region28: #{wav2edge_forward.3} parent=23 // pred_fallthru
          _
        // Predicated region
        $region29: #{wav2edge_forward.3} parent=23 // pred_check
          %p210 = pneg %p105
        $region30: #{wav2edge_forward.3} parent=23 // pred_check_branch
          %212 = sbr.rel (%p210) target = $region32
        $region31: #{wav2edge_forward.3} parent=23 // pred_region
          %s213 = sand.u32 %s95, 1
          %s214 = scalar_lea.sflag [#allocation7], %s213
          %s215 = sand.u32 %s95, 1
          %s216 = smul.addr %s215, 128
          %s217 = scalar_lea.vmem [#allocation6], %s216
          %219 = vsyncadd %s214, 0
          %s220 = smul.addr %s17, 16
          %s221 = smul.addr %s220, 8
          %s222 = scalar_lea.hbm %s3, %s221
          %s223 = sshll.u32 %s222, 4
          %s224 = int_to_ptr.hbm [resolvable:$true] %s223
          %s225 = sshll.u32 %s217, 4
          %s226 = int_to_ptr.vmem [resolvable:$true] %s225
          %231 = dma.hbm_to_vmem [thread:$0]  %s224, 2048, %s226, %s214, 128, 128, 8
        $region32: #{wav2edge_forward.3} parent=23 // pred_fallthru
          _
        // Predicated region
        $region33: #{wav2edge_forward.3} parent=23 // pred_check
          %p232 = pneg %p131
        $region34: #{wav2edge_forward.3} parent=23 // pred_check_branch
          %234 = sbr.rel (%p232) target = $region36
        $region35: #{wav2edge_forward.3} parent=23 // pred_region
          %p235 = scmp.lt.s32.totalorder %s17, 1
          %s236 = scalar_select %p235, %s17, 1
          %s237 = scalar_lea.vmem %s4, %s236
        $region36: #{wav2edge_forward.3} parent=23 // pred_fallthru
          _
      $region24: #{wav2edge_forward.3} parent=5 // pred_fallthru
        _
      %p238 = scmp.le.s32.totalorder 1, %s17
      %p239 = scmp.lt.s32.totalorder %s17, 3
      %p240 = pnand %p238, %p239
      %p241 = pneg %p240
      // Predicated region
      $region37: #{wav2edge_forward.3} parent=5 // pred_check
        _
      $region38: #{wav2edge_forward.3} parent=5 // pred_check_branch
        %243 = sbr.rel (%p240) target = $region40
      $region39: #{wav2edge_forward.3} parent=5 // pred_region
        %s244 = ssub.s32 %s17, 1
        %s245 = sand.u32 %s72, 1
        %s246 = scalar_lea.sflag [#allocation5], %s245
        %s247 = sand.u32 %s72, 1
        %s248 = smul.addr %s247, 128
        %s249 = scalar_lea.vmem [#allocation4], %s248
        // Predicated region
        $region41: #{wav2edge_forward.3} parent=39 // pred_check
          %p250 = pneg %p85
        $region42: #{wav2edge_forward.3} parent=39 // pred_check_branch
          %252 = sbr.rel (%p250) target = $region44
        $region43: #{wav2edge_forward.3} parent=39 // pred_region
          %254 = dma.done %s246, 2048
        $region44: #{wav2edge_forward.3} parent=39 // pred_fallthru
          _
        %s255 = sand.u32 %s98, 1
        %s256 = scalar_lea.sflag [#allocation7], %s255
        %s257 = sand.u32 %s98, 1
        %s258 = smul.addr %s257, 128
        %s259 = scalar_lea.vmem [#allocation6], %s258
        // Predicated region
        $region45: #{wav2edge_forward.3} parent=39 // pred_check
          %p260 = pneg %p111
        $region46: #{wav2edge_forward.3} parent=39 // pred_check_branch
          %262 = sbr.rel (%p260) target = $region48
        $region47: #{wav2edge_forward.3} parent=39 // pred_region
          %264 = dma.done %s256, 2048
        $region48: #{wav2edge_forward.3} parent=39 // pred_fallthru
          _
        %p265 = pneg %p38
        %p266 = pneg %p35
        %p267 = pneg %p59
        %p268 = pneg %p56
        %s269 = sand.u32 %s72, 1
        %s270 = scalar_lea.sflag [#allocation5], %s269
        %s271 = sand.u32 %s72, 1
        %s272 = smul.addr %s271, 128
        %s273 = scalar_lea.vmem [#allocation4], %s272
        %p274 = pneg %p85
        %p275 = pneg %p82
        %s276 = sand.u32 %s98, 1
        %s277 = scalar_lea.sflag [#allocation7], %s276
        %s278 = sand.u32 %s98, 1
        %s279 = smul.addr %s278, 128
        %s280 = scalar_lea.vmem [#allocation6], %s279
        %p281 = pneg %p111
        %p282 = pneg %p108
        %p283 = scmp.lt.s32.totalorder %s22, 1
        %s284 = scalar_select %p283, %s22, 1
        %s285 = scalar_lea.vmem %s4, %s284
        %p286 = pneg %p137
        %p287 = pneg %p134
        %p288 = pneg %p163
        %p289 = pneg %p160
        %s290 = sand.u32 %s150, 1
        %s291 = sand.u32 %s150, 1
        %s292 = smul.addr %s291, 16
        %s293 = scalar_lea.vmem [#allocation8], %s292
        %p294 = scmp.lt.s32.totalorder %s22, 1
        %s295 = scalar_select %p294, %s22, 1
        %s296 = scalar_lea.vmem %s4, %s295
        %v297 = vld [vmem:[%s1] sm:$0xff]
        %v298 = vld [vmem:[%s1 + $0x8] sm:$0xff]
        %v299 = vld [vmem:[%s249] sm:$0xff]
        %v300 = vld [vmem:[%s249 + $0x8] sm:$0xff]
        %v301 = vld [vmem:[%s249 + $0x10] sm:$0xff]
        %v302 = vld [vmem:[%s249 + $0x18] sm:$0xff]
        %v303 = vld [vmem:[%s249 + $0x20] sm:$0xff]
        %v304 = vld [vmem:[%s249 + $0x28] sm:$0xff]
        %v305 = vld [vmem:[%s249 + $0x30] sm:$0xff]
        %v306 = vld [vmem:[%s249 + $0x38] sm:$0xff]
        %v307 = vld [vmem:[%s249 + $0x40] sm:$0xff]
        %v308 = vld [vmem:[%s249 + $0x48] sm:$0xff]
        %v309 = vld [vmem:[%s249 + $0x50] sm:$0xff]
        %v310 = vld [vmem:[%s249 + $0x58] sm:$0xff]
        %v311 = vld [vmem:[%s249 + $0x60] sm:$0xff]
        %v312 = vld [vmem:[%s249 + $0x68] sm:$0xff]
        %v313 = vld [vmem:[%s249 + $0x70] sm:$0xff]
        %v314 = vld [vmem:[%s249 + $0x78] sm:$0xff]
        %v315 = vld [vmem:[%s296] sm:$0x1]
        %v317 = vperm.slane %v315, 0
        %319 = vmatpush.msra.mxu0 %v314
        %320 = vmatpush.msra.mxu0 %v313
        %321 = vmatpush.msra.mxu0 %v312
        %322 = vmatpush.msra.mxu0 %v311
        %323 = vmatpush.msra.mxu0 %v310
        %324 = vmatpush.msra.mxu0 %v309
        %325 = vmatpush.msra.mxu0 %v308
        %326 = vmatpush.msra.mxu0 %v307
        %327 = vmatpush.msra.mxu0 %v306
        %328 = vmatpush.msra.mxu0 %v305
        %329 = vmatpush.msra.mxu0 %v304
        %330 = vmatpush.msra.mxu0 %v303
        %331 = vmatpush.msra.mxu0 %v302
        %332 = vmatpush.msra.mxu0 %v301
        %333 = vmatpush.msra.mxu0 %v300
        %334 = vmatpush.msra.mxu0 %v299
        %335 = vmatmul.f32.gmra.mxu0 %v297
        %v336 = vpop.f32.mrf.mxu0
        %v337 = vadd.f32 %v317, %v336
        %338 = vmatmul.f32.gmra.mxu0 %v298
        %v339 = vpop.f32.mrf.mxu0
        %v340 = vadd.f32 %v317, %v339
        %341 = vdwg.mxu0
        %342 = vst [vmem:[#allocation2] sm:$0xff] %v337
        %343 = vst [vmem:[#allocation2 + $0x8] sm:$0xff] %v340
        %344 = vst [vmem:[#allocation3] sm:$0x3] 0.0
        %v345 = vld [vmem:[%s0] sm:$0x3]
        %p346 = scmp.eq.s32.totalorder %s22, 1
        loop: start=0, step=1, limit=2
        $region49: #{wav2edge_forward.3} parent=39 // loop_pre_header
          _
        $region50: #{wav2edge_forward.3} parent=39 // loop_header
          %s348 = sphi 0, %s352
          %p349 = scmp.ge.s32.totalorder %s348, 2
        $region51: #{wav2edge_forward.3} parent=39 // loop_header_branch
          %351 = sbr.rel (%p349) target = $region55
        $region52: #{wav2edge_forward.3} parent=39 // loop_body
          %s353 = smul.u32 %s348, 4
          %s354 = ssub.s32 7, %s353
          %s355 = scalar_select %p346, %s354, %s353
          %s356 = smul.u32 %s355, 2
          %v357 = vstv %s355
          %vm358 = vcmp.lt.s32.totalorder %v357, %v345
          %v359 = vsel %vm358, 1, 0
          %v360 = vcvt.s32.f32 %v359
          %v361 = vld [vmem:[#allocation3] sm:$0x3]
          %s362 = scalar_lea.vmem [#allocation2], %s356
          %v363 = vld [vmem:[%s362] sm:$0x3]
          %v364 = vld [vmem:[%s259] sm:$0xff]
          %v365 = vld [vmem:[%s259 + $0x8] sm:$0xff]
          %v366 = vld [vmem:[%s259 + $0x10] sm:$0xff]
          %v367 = vld [vmem:[%s259 + $0x18] sm:$0xff]
          %v368 = vld [vmem:[%s259 + $0x20] sm:$0xff]
          %v369 = vld [vmem:[%s259 + $0x28] sm:$0xff]
          %v370 = vld [vmem:[%s259 + $0x30] sm:$0xff]
          %v371 = vld [vmem:[%s259 + $0x38] sm:$0xff]
          %v372 = vld [vmem:[%s259 + $0x40] sm:$0xff]
          %v373 = vld [vmem:[%s259 + $0x48] sm:$0xff]
          %v374 = vld [vmem:[%s259 + $0x50] sm:$0xff]
          %v375 = vld [vmem:[%s259 + $0x58] sm:$0xff]
          %v376 = vld [vmem:[%s259 + $0x60] sm:$0xff]
          %v377 = vld [vmem:[%s259 + $0x68] sm:$0xff]
          %v378 = vld [vmem:[%s259 + $0x70] sm:$0xff]
          %v379 = vld [vmem:[%s259 + $0x78] sm:$0xff]
          %380 = vmatpush.msra.mxu0 %v379
          %381 = vmatpush.msra.mxu0 %v378
          %382 = vmatpush.msra.mxu0 %v377
          %383 = vmatpush.msra.mxu0 %v376
          %384 = vmatpush.msra.mxu0 %v375
          %385 = vmatpush.msra.mxu0 %v374
          %386 = vmatpush.msra.mxu0 %v373
          %387 = vmatpush.msra.mxu0 %v372
          %388 = vmatpush.msra.mxu0 %v371
          %389 = vmatpush.msra.mxu0 %v370
          %390 = vmatpush.msra.mxu0 %v369
          %391 = vmatpush.msra.mxu0 %v368
          %392 = vmatpush.msra.mxu0 %v367
          %393 = vmatpush.msra.mxu0 %v366
          %394 = vmatpush.msra.mxu0 %v365
          %395 = vmatpush.msra.mxu0 %v364
          %396 = vmatmul.f32.gmra.mxu0 %v361
          %v397 = vpop.f32.mrf.mxu0
          %v398 = vadd.f32 0.0, %v397
          %399 = vdwg.mxu0
          %v400 = vadd.f32 %v363, %v398
          %v401 = vtanh.pop %v400
          %v402 = vsub.f32 %v401, %v361
          %404 = vset.pattern.permute.xlu0 0
          %405 = vperm.xlu0 %404, %v360
          %v406 = vpop.permute.xlu0 %405
          %v408 = vmul.f32 %v406, %v402
          %v409 = vadd.f32 %v361, %v408
          %410 = vst [vmem:[#allocation3] sm:$0x3] %v409
          %v411 = vmul.f32 %v409, %v406
          %s412 = scalar_lea.vmem %s293, %s356 [#allocation8]
          %413 = vst [vmem:[%s412] sm:$0x3] %v411
          %s414 = sadd.s32 %s353, 1
          %s415 = ssub.s32 6, %s353
          %s416 = scalar_select %p346, %s415, %s414
          %s417 = smul.u32 %s416, 2
          %v418 = vstv %s416
          %vm419 = vcmp.lt.s32.totalorder %v418, %v345
          %v420 = vsel %vm419, 1, 0
          %v421 = vcvt.s32.f32 %v420
          %v422 = vld [vmem:[#allocation3] sm:$0x3]
          %s423 = scalar_lea.vmem [#allocation2], %s417
          %v424 = vld [vmem:[%s423] sm:$0x3]
          %v425 = vld [vmem:[%s259] sm:$0xff]
          %v426 = vld [vmem:[%s259 + $0x8] sm:$0xff]
          %v427 = vld [vmem:[%s259 + $0x10] sm:$0xff]
          %v428 = vld [vmem:[%s259 + $0x18] sm:$0xff]
          %v429 = vld [vmem:[%s259 + $0x20] sm:$0xff]
          %v430 = vld [vmem:[%s259 + $0x28] sm:$0xff]
          %v431 = vld [vmem:[%s259 + $0x30] sm:$0xff]
          %v432 = vld [vmem:[%s259 + $0x38] sm:$0xff]
          %v433 = vld [vmem:[%s259 + $0x40] sm:$0xff]
          %v434 = vld [vmem:[%s259 + $0x48] sm:$0xff]
          %v435 = vld [vmem:[%s259 + $0x50] sm:$0xff]
          %v436 = vld [vmem:[%s259 + $0x58] sm:$0xff]
          %v437 = vld [vmem:[%s259 + $0x60] sm:$0xff]
          %v438 = vld [vmem:[%s259 + $0x68] sm:$0xff]
          %v439 = vld [vmem:[%s259 + $0x70] sm:$0xff]
          %v440 = vld [vmem:[%s259 + $0x78] sm:$0xff]
          %441 = vmatpush.msra.mxu0 %v440
          %442 = vmatpush.msra.mxu0 %v439
          %443 = vmatpush.msra.mxu0 %v438
          %444 = vmatpush.msra.mxu0 %v437
          %445 = vmatpush.msra.mxu0 %v436
          %446 = vmatpush.msra.mxu0 %v435
          %447 = vmatpush.msra.mxu0 %v434
          %448 = vmatpush.msra.mxu0 %v433
          %449 = vmatpush.msra.mxu0 %v432
          %450 = vmatpush.msra.mxu0 %v431
          %451 = vmatpush.msra.mxu0 %v430
          %452 = vmatpush.msra.mxu0 %v429
          %453 = vmatpush.msra.mxu0 %v428
          %454 = vmatpush.msra.mxu0 %v427
          %455 = vmatpush.msra.mxu0 %v426
          %456 = vmatpush.msra.mxu0 %v425
          %457 = vmatmul.f32.gmra.mxu0 %v422
          %v458 = vpop.f32.mrf.mxu0
          %v459 = vadd.f32 0.0, %v458
          %460 = vdwg.mxu0
          %v461 = vadd.f32 %v424, %v459
          %v462 = vtanh.pop %v461
          %v463 = vsub.f32 %v462, %v422
          %465 = vset.pattern.permute.xlu0 0
          %466 = vperm.xlu0 %465, %v421
          %v467 = vpop.permute.xlu0 %466
          %v469 = vmul.f32 %v467, %v463
          %v470 = vadd.f32 %v422, %v469
          %471 = vst [vmem:[#allocation3] sm:$0x3] %v470
          %v472 = vmul.f32 %v470, %v467
          %s473 = scalar_lea.vmem %s293, %s417 [#allocation8]
          %474 = vst [vmem:[%s473] sm:$0x3] %v472
          %s475 = sadd.s32 %s353, 2
          %s476 = ssub.s32 5, %s353
          %s477 = scalar_select %p346, %s476, %s475
          %s478 = smul.u32 %s477, 2
          %v479 = vstv %s477
          %vm480 = vcmp.lt.s32.totalorder %v479, %v345
          %v481 = vsel %vm480, 1, 0
          %v482 = vcvt.s32.f32 %v481
          %v483 = vld [vmem:[#allocation3] sm:$0x3]
          %s484 = scalar_lea.vmem [#allocation2], %s478
          %v485 = vld [vmem:[%s484] sm:$0x3]
          %v486 = vld [vmem:[%s259] sm:$0xff]
          %v487 = vld [vmem:[%s259 + $0x8] sm:$0xff]
          %v488 = vld [vmem:[%s259 + $0x10] sm:$0xff]
          %v489 = vld [vmem:[%s259 + $0x18] sm:$0xff]
          %v490 = vld [vmem:[%s259 + $0x20] sm:$0xff]
          %v491 = vld [vmem:[%s259 + $0x28] sm:$0xff]
          %v492 = vld [vmem:[%s259 + $0x30] sm:$0xff]
          %v493 = vld [vmem:[%s259 + $0x38] sm:$0xff]
          %v494 = vld [vmem:[%s259 + $0x40] sm:$0xff]
          %v495 = vld [vmem:[%s259 + $0x48] sm:$0xff]
          %v496 = vld [vmem:[%s259 + $0x50] sm:$0xff]
          %v497 = vld [vmem:[%s259 + $0x58] sm:$0xff]
          %v498 = vld [vmem:[%s259 + $0x60] sm:$0xff]
          %v499 = vld [vmem:[%s259 + $0x68] sm:$0xff]
          %v500 = vld [vmem:[%s259 + $0x70] sm:$0xff]
          %v501 = vld [vmem:[%s259 + $0x78] sm:$0xff]
          %502 = vmatpush.msra.mxu0 %v501
          %503 = vmatpush.msra.mxu0 %v500
          %504 = vmatpush.msra.mxu0 %v499
          %505 = vmatpush.msra.mxu0 %v498
          %506 = vmatpush.msra.mxu0 %v497
          %507 = vmatpush.msra.mxu0 %v496
          %508 = vmatpush.msra.mxu0 %v495
          %509 = vmatpush.msra.mxu0 %v494
          %510 = vmatpush.msra.mxu0 %v493
          %511 = vmatpush.msra.mxu0 %v492
          %512 = vmatpush.msra.mxu0 %v491
          %513 = vmatpush.msra.mxu0 %v490
          %514 = vmatpush.msra.mxu0 %v489
          %515 = vmatpush.msra.mxu0 %v488
          %516 = vmatpush.msra.mxu0 %v487
          %517 = vmatpush.msra.mxu0 %v486
          %518 = vmatmul.f32.gmra.mxu0 %v483
          %v519 = vpop.f32.mrf.mxu0
          %v520 = vadd.f32 0.0, %v519
          %521 = vdwg.mxu0
          %v522 = vadd.f32 %v485, %v520
          %v523 = vtanh.pop %v522
          %v524 = vsub.f32 %v523, %v483
          %526 = vset.pattern.permute.xlu0 0
          %527 = vperm.xlu0 %526, %v482
          %v528 = vpop.permute.xlu0 %527
          %v530 = vmul.f32 %v528, %v524
          %v531 = vadd.f32 %v483, %v530
          %532 = vst [vmem:[#allocation3] sm:$0x3] %v531
          %v533 = vmul.f32 %v531, %v528
          %s534 = scalar_lea.vmem %s293, %s478 [#allocation8]
          %535 = vst [vmem:[%s534] sm:$0x3] %v533
          %s536 = sadd.s32 %s353, 3
          %s537 = ssub.s32 4, %s353
          %s538 = scalar_select %p346, %s537, %s536
          %s539 = smul.u32 %s538, 2
          %v540 = vstv %s538
          %vm541 = vcmp.lt.s32.totalorder %v540, %v345
          %v542 = vsel %vm541, 1, 0
          %v543 = vcvt.s32.f32 %v542
          %v544 = vld [vmem:[#allocation3] sm:$0x3]
          %s545 = scalar_lea.vmem [#allocation2], %s539
          %v546 = vld [vmem:[%s545] sm:$0x3]
          %v547 = vld [vmem:[%s259] sm:$0xff]
          %v548 = vld [vmem:[%s259 + $0x8] sm:$0xff]
          %v549 = vld [vmem:[%s259 + $0x10] sm:$0xff]
          %v550 = vld [vmem:[%s259 + $0x18] sm:$0xff]
          %v551 = vld [vmem:[%s259 + $0x20] sm:$0xff]
          %v552 = vld [vmem:[%s259 + $0x28] sm:$0xff]
          %v553 = vld [vmem:[%s259 + $0x30] sm:$0xff]
          %v554 = vld [vmem:[%s259 + $0x38] sm:$0xff]
          %v555 = vld [vmem:[%s259 + $0x40] sm:$0xff]
          %v556 = vld [vmem:[%s259 + $0x48] sm:$0xff]
          %v557 = vld [vmem:[%s259 + $0x50] sm:$0xff]
          %v558 = vld [vmem:[%s259 + $0x58] sm:$0xff]
          %v559 = vld [vmem:[%s259 + $0x60] sm:$0xff]
          %v560 = vld [vmem:[%s259 + $0x68] sm:$0xff]
          %v561 = vld [vmem:[%s259 + $0x70] sm:$0xff]
          %v562 = vld [vmem:[%s259 + $0x78] sm:$0xff]
          %563 = vmatpush.msra.mxu0 %v562
          %564 = vmatpush.msra.mxu0 %v561
          %565 = vmatpush.msra.mxu0 %v560
          %566 = vmatpush.msra.mxu0 %v559
          %567 = vmatpush.msra.mxu0 %v558
          %568 = vmatpush.msra.mxu0 %v557
          %569 = vmatpush.msra.mxu0 %v556
          %570 = vmatpush.msra.mxu0 %v555
          %571 = vmatpush.msra.mxu0 %v554
          %572 = vmatpush.msra.mxu0 %v553
          %573 = vmatpush.msra.mxu0 %v552
          %574 = vmatpush.msra.mxu0 %v551
          %575 = vmatpush.msra.mxu0 %v550
          %576 = vmatpush.msra.mxu0 %v549
          %577 = vmatpush.msra.mxu0 %v548
          %578 = vmatpush.msra.mxu0 %v547
          %579 = vmatmul.f32.gmra.mxu0 %v544
          %v580 = vpop.f32.mrf.mxu0
          %v581 = vadd.f32 0.0, %v580
          %582 = vdwg.mxu0
          %v583 = vadd.f32 %v546, %v581
          %v584 = vtanh.pop %v583
          %v585 = vsub.f32 %v584, %v544
          %587 = vset.pattern.permute.xlu0 0
          %588 = vperm.xlu0 %587, %v543
          %v589 = vpop.permute.xlu0 %588
          %v591 = vmul.f32 %v589, %v585
          %v592 = vadd.f32 %v544, %v591
          %593 = vst [vmem:[#allocation3] sm:$0x3] %v592
          %v594 = vmul.f32 %v592, %v589
          %s595 = scalar_lea.vmem %s293, %s539 [#allocation8]
          %596 = vst [vmem:[%s595] sm:$0x3] %v594
        $region53: #{wav2edge_forward.3} parent=39 // loop_footer
          %s352 = sadd.s32 1, %s348
        $region54: #{wav2edge_forward.3} parent=39 // loop_footer_branch
          %347 = sbr.rel target = $region50
        $region55: #{wav2edge_forward.3} parent=39 // loop_exit
          _
        %s597 = sand.u32 %s150, 1
        %s598 = sand.u32 %s150, 1
        %s599 = smul.addr %s598, 16
        %s600 = scalar_lea.vmem [#allocation8], %s599
        // Predicated region
        $region56: #{wav2edge_forward.3} parent=39 // pred_check
          %p601 = pneg %p160
        $region57: #{wav2edge_forward.3} parent=39 // pred_check_branch
          %603 = sbr.rel (%p601) target = $region59
        $region58: #{wav2edge_forward.3} parent=39 // pred_region
          %s604 = smul.addr %s22, 8
          %s605 = scalar_lea.vmem %s5, %s604
          // Predicated region
          $region60: #{wav2edge_forward.3} parent=58 // pred_check
            _
          $region61: #{wav2edge_forward.3} parent=58 // pred_check_branch
            %607 = sbr.rel (0) target = $region63
          $region62: #{wav2edge_forward.3} parent=58 // pred_region
            // Predicated region
            $region64: #{wav2edge_forward.3} parent=62 // pred_check
              _
            $region65: #{wav2edge_forward.3} parent=62 // pred_check_branch
              %609 = sbr.rel (0) target = $region67
            $region66: #{wav2edge_forward.3} parent=62 // pred_region
              // Predicated region
              $region79: #{wav2edge_forward.3} parent=66 // pred_check
                _
              $region80: #{wav2edge_forward.3} parent=66 // pred_check_branch
                %627 = sbr.rel (0) target = $region82
              $region81: #{wav2edge_forward.3} parent=66 // pred_region
                loop: start=0, step=1, limit=1
                $region83: #{wav2edge_forward.3} parent=81 // loop_pre_header
                  _
                $region84: #{wav2edge_forward.3} parent=81 // loop_header
                  %s629 = sphi 0, %s633
                  %p630 = scmp.ge.s32.totalorder %s629, 1
                  %s634 = sphi %s600, %s600
                  %s635 = sphi %s605, %s605
                $region85: #{wav2edge_forward.3} parent=81 // loop_header_branch
                  %632 = sbr.rel (%p630) target = $region89
                $region86: #{wav2edge_forward.3} parent=81 // loop_body
                  %v636 = vld [vmem:[%s634] sm:$0xff]
                  %637 = vst [vmem:[%s635] sm:$0xff] %v636
                  %v638 = vld [vmem:[%s634 + $0x8] sm:$0xff]
                  %639 = vst [vmem:[%s635 + $0x10] sm:$0xff] %v638
                $region87: #{wav2edge_forward.3} parent=81 // loop_footer
                  %s633 = sadd.s32 1, %s629
                $region88: #{wav2edge_forward.3} parent=81 // loop_footer_branch
                  %628 = sbr.rel target = $region84
                $region89: #{wav2edge_forward.3} parent=81 // loop_exit
                  _
              $region82: #{wav2edge_forward.3} parent=66 // pred_fallthru
                _
              // Predicated region
              $region90: #{wav2edge_forward.3} parent=66 // pred_check
                _
              $region91: #{wav2edge_forward.3} parent=66 // pred_check_branch
                %641 = sbr.rel target = $region93
              $region92: #{wav2edge_forward.3} parent=66 // pred_region
                _
              $region93: #{wav2edge_forward.3} parent=66 // pred_fallthru
                _
            $region67: #{wav2edge_forward.3} parent=62 // pred_fallthru
              _
            // Predicated region
            $region68: #{wav2edge_forward.3} parent=62 // pred_check
              _
            $region69: #{wav2edge_forward.3} parent=62 // pred_check_branch
              %611 = sbr.rel target = $region71
            $region70: #{wav2edge_forward.3} parent=62 // pred_region
              %s613 = ssub.s32 256, 1
              loop: start=0, step=1, limit=1
              $region72: #{wav2edge_forward.3} parent=70 // loop_pre_header
                _
              $region73: #{wav2edge_forward.3} parent=70 // loop_header
                %s615 = sphi 0, %s619
                %p616 = scmp.ge.s32.totalorder %s615, 1
                %s620 = sphi %s600, %s600
                %s621 = sphi %s605, %s605
              $region74: #{wav2edge_forward.3} parent=70 // loop_header_branch
                %618 = sbr.rel (%p616) target = $region78
              $region75: #{wav2edge_forward.3} parent=70 // loop_body
                %v622 = vld [vmem:[%s620] sm:%s613]
                %623 = vst [vmem:[%s621] sm:%s613] %v622
                %v624 = vld [vmem:[%s620 + $0x8] sm:%s613]
                %625 = vst [vmem:[%s621 + $0x10] sm:%s613] %v624
              $region76: #{wav2edge_forward.3} parent=70 // loop_footer
                %s619 = sadd.s32 1, %s615
              $region77: #{wav2edge_forward.3} parent=70 // loop_footer_branch
                %614 = sbr.rel target = $region73
              $region78: #{wav2edge_forward.3} parent=70 // loop_exit
                _
            $region71: #{wav2edge_forward.3} parent=62 // pred_fallthru
              _
          $region63: #{wav2edge_forward.3} parent=58 // pred_fallthru
            _
          %642 = vnop
        $region59: #{wav2edge_forward.3} parent=39 // pred_fallthru
          _
      $region40: #{wav2edge_forward.3} parent=5 // pred_fallthru
        _
      %p643 = scmp.le.s32.totalorder 2, %s17
      // Predicated region
      $region94: #{wav2edge_forward.3} parent=5 // pred_check
        %p644 = pneg %p643
      $region95: #{wav2edge_forward.3} parent=5 // pred_check_branch
        %646 = sbr.rel (%p644) target = $region97
      $region96: #{wav2edge_forward.3} parent=5 // pred_region
        %s647 = ssub.s32 %s17, 2
        // Predicated region
        $region98: #{wav2edge_forward.3} parent=96 // pred_check
          %p648 = pneg %p166
        $region99: #{wav2edge_forward.3} parent=96 // pred_check_branch
          %650 = sbr.rel (%p648) target = $region101
        $region100: #{wav2edge_forward.3} parent=96 // pred_region
          %s651 = sand.u32 %s151, 1
          %s652 = sand.u32 %s151, 1
          %s653 = smul.addr %s652, 16
          %s654 = scalar_lea.vmem [#allocation8], %s653
        $region101: #{wav2edge_forward.3} parent=96 // pred_fallthru
          _
      $region97: #{wav2edge_forward.3} parent=5 // pred_fallthru
        _
    $region6: #{wav2edge_forward.3} parent=1 // loop_footer
      %s21 = sadd.s32 1, %s17
    $region7: #{wav2edge_forward.3} parent=1 // loop_footer_branch
      %16 = sbr.rel target = $region3
    $region8: #{wav2edge_forward.3} parent=1 // loop_exit
      _
    %655 = vsyncpa [#allocation5], 1
    %s656 = scalar_lea.sflag [#allocation5], 1
    %657 = vsyncpa %s656, 1
    %658 = vsyncpa [#allocation7], 1
    %s659 = scalar_lea.sflag [#allocation7], 1
    %660 = vsyncpa %s659, 1

// kernel: wav2edge_forward.4
$region0: #{wav2edge_forward.4}
  #allocation0 [shape = 'u32[]', space=smem, size = 0x4, offset = 0x4, fixed_abs, tag = 'smem constant byte address 0x4 - core index']
  #allocation1 [shape = 'u32[72,128]{1,0:T(1,128)}', space=vmem, size = 0x9000, scoped, tag = 'internal scratch']
  #allocation2 [shape = 'f32[16,128]{1,0:T(8,128)}', space=vmem, size = 0x2000, scoped, tag = 'scratch operand']
  #allocation3 [shape = 'f32[2,128]{1,0:T(2,128)}', space=vmem, size = 0x400, scoped, tag = 'scratch operand']
  %s0 = inlined_call_operand.vmem [shape: s32[2,1], index: 0, kind: input, shape index: {}]
  %s1 = inlined_call_operand.vmem [shape: f32[16,256], index: 1, kind: input, shape index: {}]
  %s2 = inlined_call_operand.hbm [shape: f32[2,256,128], index: 2, kind: input, shape index: {}]
  %s3 = inlined_call_operand.hbm [shape: f32[2,128,128], index: 3, kind: input, shape index: {}]
  %s4 = inlined_call_operand.vmem [shape: f32[2,1,128], index: 4, kind: input, shape index: {}]
  %s5 = inlined_call_operand.vmem [shape: f32[16,256], index: 5, kind: output, shape index: {}]
  %s6 = sld [smem:[#allocation0]]
  $region102: #{wav2edge_forward.4} parent=0
    _
  %s8 = ssub.s32 1, %s6
  %s9 = scalar_select 0, %s8, %s6
  $region1: #{wav2edge_forward.4} parent=0
    #allocation4 [shape = 'u8[262144]{0}', space=vmem, size = 0x40000, scoped, tag = 'input window, operand 2']
    #allocation5 [shape = 's32[2]{0}', space=sflag, size = 0x8, scoped, tag = 'scoped memory for wav2edge_forward.4']
    #allocation6 [shape = 'u8[131072]{0}', space=vmem, size = 0x20000, scoped, tag = 'input window, operand 3']
    #allocation7 [shape = 's32[2]{0}', space=sflag, size = 0x8, scoped, tag = 'scoped memory for wav2edge_forward.4']
    #allocation8 [shape = 'u8[16384]{0}', space=vmem, size = 0x4000, scoped, tag = 'output window, operand 0']
    %10 = vsyncpa [#allocation5], 0
    %s11 = scalar_lea.sflag [#allocation5], 1
    %12 = vsyncpa %s11, 0
    %13 = vsyncpa [#allocation7], 0
    %s14 = scalar_lea.sflag [#allocation7], 1
    %15 = vsyncpa %s14, 0
    loop: start=0, step=1, limit=4
    $region2: #{wav2edge_forward.4} parent=1 // loop_pre_header
      _
    $region3: #{wav2edge_forward.4} parent=1 // loop_header
      %s17 = sphi 0, %s21
      %p18 = scmp.ge.s32.totalorder %s17, 4
      %s25 = sphi 0, %s25
      %s27 = sphi 0, %s25
      %s28 = sphi 0, %s27
      %s42 = sphi 0, %s28
      %s46 = sphi 0, %s46
      %s48 = sphi 0, %s46
      %s49 = sphi 0, %s48
      %s63 = sphi 0, %s49
      %s69 = sphi 0, %s71
      %s72 = sphi 0, %s69
      %s73 = sphi 0, %s72
      %s89 = sphi 0, %s73
      %s95 = sphi 0, %s97
      %s98 = sphi 0, %s95
      %s99 = sphi 0, %s98
      %s115 = sphi 0, %s99
      %s121 = sphi 0, %s123
      %s124 = sphi 0, %s121
      %s125 = sphi 0, %s124
      %s141 = sphi 0, %s125
      %s147 = sphi 0, %s149
      %s150 = sphi 0, %s147
      %s151 = sphi 0, %s150
      %s167 = sphi 0, %s151
    $region4: #{wav2edge_forward.4} parent=1 // loop_header_branch
      %20 = sbr.rel (%p18) target = $region8
    $region5: #{wav2edge_forward.4} parent=1 // loop_body
      %s22 = ssub.s32 %s17, 1
      %s23 = ssub.s32 %s17, 2
      %s24 = sadd.s32 %s17, 1
      %s26 = sadd.s32 %s25, 1
      %p29 = scmp.eq.s32.totalorder %s17, 1
      %p30 = scmp.ne.s32.totalorder %s25, %s27
      %p31 = scmp.eq.s32.totalorder %s17, 0
      %p32 = por %p30, %p31
      %p33 = scmp.ne.s32.totalorder %s25, %s27
      %p34 = scmp.eq.s32.totalorder %s22, 1
      %p35 = por %p33, %p34
      %p36 = scmp.ne.s32.totalorder %s27, %s28
      %p37 = scmp.eq.s32.totalorder %s22, 0
      %p38 = por %p36, %p37
      %p39 = scmp.ne.s32.totalorder %s27, %s28
      %p40 = scmp.eq.s32.totalorder %s23, 1
      %p41 = por %p39, %p40
      %p43 = scmp.ne.s32.totalorder %s28, %s42
      %p44 = scmp.eq.s32.totalorder %s23, 0
      %p45 = por %p43, %p44
      %s47 = sadd.s32 %s46, 1
      %p50 = scmp.eq.s32.totalorder %s17, 1
      %p51 = scmp.ne.s32.totalorder %s46, %s48
      %p52 = scmp.eq.s32.totalorder %s17, 0
      %p53 = por %p51, %p52
      %p54 = scmp.ne.s32.totalorder %s46, %s48
      %p55 = scmp.eq.s32.totalorder %s22, 1
      %p56 = por %p54, %p55
      %p57 = scmp.ne.s32.totalorder %s48, %s49
      %p58 = scmp.eq.s32.totalorder %s22, 0
      %p59 = por %p57, %p58
      %p60 = scmp.ne.s32.totalorder %s48, %s49
      %p61 = scmp.eq.s32.totalorder %s23, 1
      %p62 = por %p60, %p61
      %p64 = scmp.ne.s32.totalorder %s49, %s63
      %p65 = scmp.eq.s32.totalorder %s23, 0
      %p66 = por %p64, %p65
      %s67 = ssub.s32 %s17, %s24
      %p68 = scmp.eq.s32.totalorder %s67, 0
      %s70 = sadd.s32 %s69, 1
      %s71 = scalar_select %p68, %s69, %s70
      %p74 = pneg %p68
      %p75 = scmp.eq.s32.totalorder %s17, 1
      %p76 = por %p74, %p75
      %p77 = scmp.ne.s32.totalorder %s69, %s72
      %p78 = scmp.eq.s32.totalorder %s17, 0
      %p79 = por %p77, %p78
      %p80 = scmp.ne.s32.totalorder %s69, %s72
      %p81 = scmp.eq.s32.totalorder %s22, 1
      %p82 = por %p80, %p81
      %p83 = scmp.ne.s32.totalorder %s72, %s73
      %p84 = scmp.eq.s32.totalorder %s22, 0
      %p85 = por %p83, %p84
      %p86 = scmp.ne.s32.totalorder %s72, %s73
      %p87 = scmp.eq.s32.totalorder %s23, 1
      %p88 = por %p86, %p87
      %p90 = scmp.ne.s32.totalorder %s73, %s89
      %p91 = scmp.eq.s32.totalorder %s23, 0
      %p92 = por %p90, %p91
      %s93 = ssub.s32 %s17, %s24
      %p94 = scmp.eq.s32.totalorder %s93, 0
      %s96 = sadd.s32 %s95, 1
      %s97 = scalar_select %p94, %s95, %s96
      %p100 = pneg %p94
      %p101 = scmp.eq.s32.totalorder %s17, 1
      %p102 = por %p100, %p101
      %p103 = scmp.ne.s32.totalorder %s95, %s98
      %p104 = scmp.eq.s32.totalorder %s17, 0
      %p105 = por %p103, %p104
      %p106 = scmp.ne.s32.totalorder %s95, %s98
      %p107 = scmp.eq.s32.totalorder %s22, 1
      %p108 = por %p106, %p107
      %p109 = scmp.ne.s32.totalorder %s98, %s99
      %p110 = scmp.eq.s32.totalorder %s22, 0
      %p111 = por %p109, %p110
      %p112 = scmp.ne.s32.totalorder %s98, %s99
      %p113 = scmp.eq.s32.totalorder %s23, 1
      %p114 = por %p112, %p113
      %p116 = scmp.ne.s32.totalorder %s99, %s115
      %p117 = scmp.eq.s32.totalorder %s23, 0
      %p118 = por %p116, %p117
      %s119 = ssub.s32 %s17, %s24
      %p120 = scmp.eq.s32.totalorder %s119, 0
      %s122 = sadd.s32 %s121, 1
      %s123 = scalar_select %p120, %s121, %s122
      %p126 = pneg %p120
      %p127 = scmp.eq.s32.totalorder %s17, 1
      %p128 = por %p126, %p127
      %p129 = scmp.ne.s32.totalorder %s121, %s124
      %p130 = scmp.eq.s32.totalorder %s17, 0
      %p131 = por %p129, %p130
      %p132 = scmp.ne.s32.totalorder %s121, %s124
      %p133 = scmp.eq.s32.totalorder %s22, 1
      %p134 = por %p132, %p133
      %p135 = scmp.ne.s32.totalorder %s124, %s125
      %p136 = scmp.eq.s32.totalorder %s22, 0
      %p137 = por %p135, %p136
      %p138 = scmp.ne.s32.totalorder %s124, %s125
      %p139 = scmp.eq.s32.totalorder %s23, 1
      %p140 = por %p138, %p139
      %p142 = scmp.ne.s32.totalorder %s125, %s141
      %p143 = scmp.eq.s32.totalorder %s23, 0
      %p144 = por %p142, %p143
      %s145 = ssub.s32 %s17, %s24
      %p146 = scmp.eq.s32.totalorder %s145, 0
      %s148 = sadd.s32 %s147, 1
      %s149 = scalar_select %p146, %s147, %s148
      %p152 = pneg %p146
      %p153 = scmp.eq.s32.totalorder %s17, 1
      %p154 = por %p152, %p153
      %p155 = scmp.ne.s32.totalorder %s147, %s150
      %p156 = scmp.eq.s32.totalorder %s17, 0
      %p157 = por %p155, %p156
      %p158 = scmp.ne.s32.totalorder %s147, %s150
      %p159 = scmp.eq.s32.totalorder %s22, 1
      %p160 = por %p158, %p159
      %p161 = scmp.ne.s32.totalorder %s150, %s151
      %p162 = scmp.eq.s32.totalorder %s22, 0
      %p163 = por %p161, %p162
      %p164 = scmp.ne.s32.totalorder %s150, %s151
      %p165 = scmp.eq.s32.totalorder %s23, 1
      %p166 = por %p164, %p165
      %p168 = scmp.ne.s32.totalorder %s151, %s167
      %p169 = scmp.eq.s32.totalorder %s23, 0
      %p170 = por %p168, %p169
      %p171 = scmp.le.s32.totalorder 1, %s17
      %p172 = scmp.lt.s32.totalorder %s17, 3
      %p173 = pnand %p171, %p172
      %p174 = pneg %p173
      // Predicated region
      $region9: #{wav2edge_forward.4} parent=5 // pred_check
        _
      $region10: #{wav2edge_forward.4} parent=5 // pred_check_branch
        %176 = sbr.rel (%p173) target = $region12
      $region11: #{wav2edge_forward.4} parent=5 // pred_region
        %s177 = ssub.s32 %s17, 1
        // Predicated region
        $region13: #{wav2edge_forward.4} parent=11 // pred_check
          %p178 = pneg %p38
        $region14: #{wav2edge_forward.4} parent=11 // pred_check_branch
          %180 = sbr.rel (%p178) target = $region16
        $region15: #{wav2edge_forward.4} parent=11 // pred_region
          _
        $region16: #{wav2edge_forward.4} parent=11 // pred_fallthru
          _
        // Predicated region
        $region17: #{wav2edge_forward.4} parent=11 // pred_check
          %p181 = pneg %p59
        $region18: #{wav2edge_forward.4} parent=11 // pred_check_branch
          %183 = sbr.rel (%p181) target = $region20
        $region19: #{wav2edge_forward.4} parent=11 // pred_region
          _
        $region20: #{wav2edge_forward.4} parent=11 // pred_fallthru
          _
      $region12: #{wav2edge_forward.4} parent=5 // pred_fallthru
        _
      %p184 = scmp.lt.s32.totalorder %s17, 2
      // Predicated region
      $region21: #{wav2edge_forward.4} parent=5 // pred_check
        %p185 = pneg %p184
      $region22: #{wav2edge_forward.4} parent=5 // pred_check_branch
        %187 = sbr.rel (%p185) target = $region24
      $region23: #{wav2edge_forward.4} parent=5 // pred_region
        // Predicated region
        $region25: #{wav2edge_forward.4} parent=23 // pred_check
          %p188 = pneg %p79
        $region26: #{wav2edge_forward.4} parent=23 // pred_check_branch
          %190 = sbr.rel (%p188) target = $region28
        $region27: #{wav2edge_forward.4} parent=23 // pred_region
          %s191 = sand.u32 %s69, 1
          %s192 = scalar_lea.sflag [#allocation5], %s191
          %s193 = sand.u32 %s69, 1
          %s194 = smul.addr %s193, 256
          %s195 = scalar_lea.vmem [#allocation4], %s194
          %197 = vsyncadd %s192, 0
          %s198 = smul.addr %s17, 32
          %s199 = smul.addr %s198, 8
          %s200 = scalar_lea.hbm %s2, %s199
          %s201 = sshll.u32 %s200, 4
          %s202 = int_to_ptr.hbm [resolvable:$true] %s201
          %s203 = sshll.u32 %s195, 4
          %s204 = int_to_ptr.vmem [resolvable:$true] %s203
          %209 = dma.hbm_to_vmem [thread:$0]  %s202, 4096, %s204, %s192, 128, 128, 8
        $region28: #{wav2edge_forward.4} parent=23 // pred_fallthru
          _
        // Predicated region
        $region29: #{wav2edge_forward.4} parent=23 // pred_check
          %p210 = pneg %p105
        $region30: #{wav2edge_forward.4} parent=23 // pred_check_branch
          %212 = sbr.rel (%p210) target = $region32
        $region31: #{wav2edge_forward.4} parent=23 // pred_region
          %s213 = sand.u32 %s95, 1
          %s214 = scalar_lea.sflag [#allocation7], %s213
          %s215 = sand.u32 %s95, 1
          %s216 = smul.addr %s215, 128
          %s217 = scalar_lea.vmem [#allocation6], %s216
          %219 = vsyncadd %s214, 0
          %s220 = smul.addr %s17, 16
          %s221 = smul.addr %s220, 8
          %s222 = scalar_lea.hbm %s3, %s221
          %s223 = sshll.u32 %s222, 4
          %s224 = int_to_ptr.hbm [resolvable:$true] %s223
          %s225 = sshll.u32 %s217, 4
          %s226 = int_to_ptr.vmem [resolvable:$true] %s225
          %231 = dma.hbm_to_vmem [thread:$0]  %s224, 2048, %s226, %s214, 128, 128, 8
        $region32: #{wav2edge_forward.4} parent=23 // pred_fallthru
          _
        // Predicated region
        $region33: #{wav2edge_forward.4} parent=23 // pred_check
          %p232 = pneg %p131
        $region34: #{wav2edge_forward.4} parent=23 // pred_check_branch
          %234 = sbr.rel (%p232) target = $region36
        $region35: #{wav2edge_forward.4} parent=23 // pred_region
          %p235 = scmp.lt.s32.totalorder %s17, 1
          %s236 = scalar_select %p235, %s17, 1
          %s237 = scalar_lea.vmem %s4, %s236
        $region36: #{wav2edge_forward.4} parent=23 // pred_fallthru
          _
      $region24: #{wav2edge_forward.4} parent=5 // pred_fallthru
        _
      %p238 = scmp.le.s32.totalorder 1, %s17
      %p239 = scmp.lt.s32.totalorder %s17, 3
      %p240 = pnand %p238, %p239
      %p241 = pneg %p240
      // Predicated region
      $region37: #{wav2edge_forward.4} parent=5 // pred_check
        _
      $region38: #{wav2edge_forward.4} parent=5 // pred_check_branch
        %243 = sbr.rel (%p240) target = $region40
      $region39: #{wav2edge_forward.4} parent=5 // pred_region
        %s244 = ssub.s32 %s17, 1
        %s245 = sand.u32 %s72, 1
        %s246 = scalar_lea.sflag [#allocation5], %s245
        %s247 = sand.u32 %s72, 1
        %s248 = smul.addr %s247, 256
        %s249 = scalar_lea.vmem [#allocation4], %s248
        // Predicated region
        $region41: #{wav2edge_forward.4} parent=39 // pred_check
          %p250 = pneg %p85
        $region42: #{wav2edge_forward.4} parent=39 // pred_check_branch
          %252 = sbr.rel (%p250) target = $region44
        $region43: #{wav2edge_forward.4} parent=39 // pred_region
          %254 = dma.done %s246, 4096
        $region44: #{wav2edge_forward.4} parent=39 // pred_fallthru
          _
        %s255 = sand.u32 %s98, 1
        %s256 = scalar_lea.sflag [#allocation7], %s255
        %s257 = sand.u32 %s98, 1
        %s258 = smul.addr %s257, 128
        %s259 = scalar_lea.vmem [#allocation6], %s258
        // Predicated region
        $region45: #{wav2edge_forward.4} parent=39 // pred_check
          %p260 = pneg %p111
        $region46: #{wav2edge_forward.4} parent=39 // pred_check_branch
          %262 = sbr.rel (%p260) target = $region48
        $region47: #{wav2edge_forward.4} parent=39 // pred_region
          %264 = dma.done %s256, 2048
        $region48: #{wav2edge_forward.4} parent=39 // pred_fallthru
          _
        %p265 = pneg %p38
        %p266 = pneg %p35
        %p267 = pneg %p59
        %p268 = pneg %p56
        %s269 = sand.u32 %s72, 1
        %s270 = scalar_lea.sflag [#allocation5], %s269
        %s271 = sand.u32 %s72, 1
        %s272 = smul.addr %s271, 256
        %s273 = scalar_lea.vmem [#allocation4], %s272
        %p274 = pneg %p85
        %p275 = pneg %p82
        %s276 = sand.u32 %s98, 1
        %s277 = scalar_lea.sflag [#allocation7], %s276
        %s278 = sand.u32 %s98, 1
        %s279 = smul.addr %s278, 128
        %s280 = scalar_lea.vmem [#allocation6], %s279
        %p281 = pneg %p111
        %p282 = pneg %p108
        %p283 = scmp.lt.s32.totalorder %s22, 1
        %s284 = scalar_select %p283, %s22, 1
        %s285 = scalar_lea.vmem %s4, %s284
        %p286 = pneg %p137
        %p287 = pneg %p134
        %p288 = pneg %p163
        %p289 = pneg %p160
        %s290 = sand.u32 %s150, 1
        %s291 = sand.u32 %s150, 1
        %s292 = smul.addr %s291, 16
        %s293 = scalar_lea.vmem [#allocation8], %s292
        %p294 = scmp.lt.s32.totalorder %s22, 1
        %s295 = scalar_select %p294, %s22, 1
        %s296 = scalar_lea.vmem %s4, %s295
        %v297 = vld [vmem:[%s1] sm:$0xff]
        %v298 = vld [vmem:[%s1 + $0x8] sm:$0xff]
        %v299 = vld [vmem:[%s1 + $0x10] sm:$0xff]
        %v300 = vld [vmem:[%s1 + $0x18] sm:$0xff]
        %v301 = vld [vmem:[%s249] sm:$0xff]
        %v302 = vld [vmem:[%s249 + $0x8] sm:$0xff]
        %v303 = vld [vmem:[%s249 + $0x10] sm:$0xff]
        %v304 = vld [vmem:[%s249 + $0x18] sm:$0xff]
        %v305 = vld [vmem:[%s249 + $0x20] sm:$0xff]
        %v306 = vld [vmem:[%s249 + $0x28] sm:$0xff]
        %v307 = vld [vmem:[%s249 + $0x30] sm:$0xff]
        %v308 = vld [vmem:[%s249 + $0x38] sm:$0xff]
        %v309 = vld [vmem:[%s249 + $0x40] sm:$0xff]
        %v310 = vld [vmem:[%s249 + $0x48] sm:$0xff]
        %v311 = vld [vmem:[%s249 + $0x50] sm:$0xff]
        %v312 = vld [vmem:[%s249 + $0x58] sm:$0xff]
        %v313 = vld [vmem:[%s249 + $0x60] sm:$0xff]
        %v314 = vld [vmem:[%s249 + $0x68] sm:$0xff]
        %v315 = vld [vmem:[%s249 + $0x70] sm:$0xff]
        %v316 = vld [vmem:[%s249 + $0x78] sm:$0xff]
        %v317 = vld [vmem:[%s249 + $0x80] sm:$0xff]
        %v318 = vld [vmem:[%s249 + $0x88] sm:$0xff]
        %v319 = vld [vmem:[%s249 + $0x90] sm:$0xff]
        %v320 = vld [vmem:[%s249 + $0x98] sm:$0xff]
        %v321 = vld [vmem:[%s249 + $0xa0] sm:$0xff]
        %v322 = vld [vmem:[%s249 + $0xa8] sm:$0xff]
        %v323 = vld [vmem:[%s249 + $0xb0] sm:$0xff]
        %v324 = vld [vmem:[%s249 + $0xb8] sm:$0xff]
        %v325 = vld [vmem:[%s249 + $0xc0] sm:$0xff]
        %v326 = vld [vmem:[%s249 + $0xc8] sm:$0xff]
        %v327 = vld [vmem:[%s249 + $0xd0] sm:$0xff]
        %v328 = vld [vmem:[%s249 + $0xd8] sm:$0xff]
        %v329 = vld [vmem:[%s249 + $0xe0] sm:$0xff]
        %v330 = vld [vmem:[%s249 + $0xe8] sm:$0xff]
        %v331 = vld [vmem:[%s249 + $0xf0] sm:$0xff]
        %v332 = vld [vmem:[%s249 + $0xf8] sm:$0xff]
        %v333 = vld [vmem:[%s296] sm:$0x1]
        %v335 = vperm.slane %v333, 0
        %337 = vmatpush.msra.mxu0 %v316
        %338 = vmatpush.msra.mxu0 %v315
        %339 = vmatpush.msra.mxu0 %v314
        %340 = vmatpush.msra.mxu0 %v313
        %341 = vmatpush.msra.mxu0 %v312
        %342 = vmatpush.msra.mxu0 %v311
        %343 = vmatpush.msra.mxu0 %v310
        %344 = vmatpush.msra.mxu0 %v309
        %345 = vmatpush.msra.mxu0 %v308
        %346 = vmatpush.msra.mxu0 %v307
        %347 = vmatpush.msra.mxu0 %v306
        %348 = vmatpush.msra.mxu0 %v305
        %349 = vmatpush.msra.mxu0 %v304
        %350 = vmatpush.msra.mxu0 %v303
        %351 = vmatpush.msra.mxu0 %v302
        %352 = vmatpush.msra.mxu0 %v301
        %353 = vmatmul.f32.gmra.mxu0 %v297
        %v354 = vpop.f32.mrf.mxu0
        %v355 = vadd.f32 %v335, %v354
        %356 = vmatmul.f32.gmra.mxu0 %v299
        %v357 = vpop.f32.mrf.mxu0
        %v358 = vadd.f32 %v335, %v357
        %359 = vdwg.mxu0
        %360 = vmatpush.msra.mxu0 %v332
        %361 = vmatpush.msra.mxu0 %v331
        %362 = vmatpush.msra.mxu0 %v330
        %363 = vmatpush.msra.mxu0 %v329
        %364 = vmatpush.msra.mxu0 %v328
        %365 = vmatpush.msra.mxu0 %v327
        %366 = vmatpush.msra.mxu0 %v326
        %367 = vmatpush.msra.mxu0 %v325
        %368 = vmatpush.msra.mxu0 %v324
        %369 = vmatpush.msra.mxu0 %v323
        %370 = vmatpush.msra.mxu0 %v322
        %371 = vmatpush.msra.mxu0 %v321
        %372 = vmatpush.msra.mxu0 %v320
        %373 = vmatpush.msra.mxu0 %v319
        %374 = vmatpush.msra.mxu0 %v318
        %375 = vmatpush.msra.mxu0 %v317
        %376 = vmatmul.f32.gmra.mxu0 %v298
        %v377 = vpop.f32.mrf.mxu0
        %v378 = vadd.f32 %v355, %v377
        %379 = vmatmul.f32.gmra.mxu0 %v300
        %v380 = vpop.f32.mrf.mxu0
        %v381 = vadd.f32 %v358, %v380
        %382 = vdwg.mxu0
        %383 = vst [vmem:[#allocation2] sm:$0xff] %v378
        %384 = vst [vmem:[#allocation2 + $0x8] sm:$0xff] %v381
        %385 = vst [vmem:[#allocation3] sm:$0x3] 0.0
        %v386 = vld [vmem:[%s0] sm:$0x3]
        %p387 = scmp.eq.s32.totalorder %s22, 1
        loop: start=0, step=1, limit=2
        $region49: #{wav2edge_forward.4} parent=39 // loop_pre_header
          _
        $region50: #{wav2edge_forward.4} parent=39 // loop_header
          %s389 = sphi 0, %s393
          %p390 = scmp.ge.s32.totalorder %s389, 2
        $region51: #{wav2edge_forward.4} parent=39 // loop_header_branch
          %392 = sbr.rel (%p390) target = $region55
        $region52: #{wav2edge_forward.4} parent=39 // loop_body
          %s394 = smul.u32 %s389, 4
          %s395 = ssub.s32 7, %s394
          %s396 = scalar_select %p387, %s395, %s394
          %s397 = smul.u32 %s396, 2
          %v398 = vstv %s396
          %vm399 = vcmp.lt.s32.totalorder %v398, %v386
          %v400 = vsel %vm399, 1, 0
          %v401 = vcvt.s32.f32 %v400
          %v402 = vld [vmem:[#allocation3] sm:$0x3]
          %s403 = scalar_lea.vmem [#allocation2], %s397
          %v404 = vld [vmem:[%s403] sm:$0x3]
          %v405 = vld [vmem:[%s259] sm:$0xff]
          %v406 = vld [vmem:[%s259 + $0x8] sm:$0xff]
          %v407 = vld [vmem:[%s259 + $0x10] sm:$0xff]
          %v408 = vld [vmem:[%s259 + $0x18] sm:$0xff]
          %v409 = vld [vmem:[%s259 + $0x20] sm:$0xff]
          %v410 = vld [vmem:[%s259 + $0x28] sm:$0xff]
          %v411 = vld [vmem:[%s259 + $0x30] sm:$0xff]
          %v412 = vld [vmem:[%s259 + $0x38] sm:$0xff]
          %v413 = vld [vmem:[%s259 + $0x40] sm:$0xff]
          %v414 = vld [vmem:[%s259 + $0x48] sm:$0xff]
          %v415 = vld [vmem:[%s259 + $0x50] sm:$0xff]
          %v416 = vld [vmem:[%s259 + $0x58] sm:$0xff]
          %v417 = vld [vmem:[%s259 + $0x60] sm:$0xff]
          %v418 = vld [vmem:[%s259 + $0x68] sm:$0xff]
          %v419 = vld [vmem:[%s259 + $0x70] sm:$0xff]
          %v420 = vld [vmem:[%s259 + $0x78] sm:$0xff]
          %421 = vmatpush.msra.mxu0 %v420
          %422 = vmatpush.msra.mxu0 %v419
          %423 = vmatpush.msra.mxu0 %v418
          %424 = vmatpush.msra.mxu0 %v417
          %425 = vmatpush.msra.mxu0 %v416
          %426 = vmatpush.msra.mxu0 %v415
          %427 = vmatpush.msra.mxu0 %v414
          %428 = vmatpush.msra.mxu0 %v413
          %429 = vmatpush.msra.mxu0 %v412
          %430 = vmatpush.msra.mxu0 %v411
          %431 = vmatpush.msra.mxu0 %v410
          %432 = vmatpush.msra.mxu0 %v409
          %433 = vmatpush.msra.mxu0 %v408
          %434 = vmatpush.msra.mxu0 %v407
          %435 = vmatpush.msra.mxu0 %v406
          %436 = vmatpush.msra.mxu0 %v405
          %437 = vmatmul.f32.gmra.mxu0 %v402
          %v438 = vpop.f32.mrf.mxu0
          %v439 = vadd.f32 0.0, %v438
          %440 = vdwg.mxu0
          %v441 = vadd.f32 %v404, %v439
          %v442 = vtanh.pop %v441
          %v443 = vsub.f32 %v442, %v402
          %445 = vset.pattern.permute.xlu0 0
          %446 = vperm.xlu0 %445, %v401
          %v447 = vpop.permute.xlu0 %446
          %v449 = vmul.f32 %v447, %v443
          %v450 = vadd.f32 %v402, %v449
          %451 = vst [vmem:[#allocation3] sm:$0x3] %v450
          %v452 = vmul.f32 %v450, %v447
          %s453 = scalar_lea.vmem %s293, %s397 [#allocation8]
          %454 = vst [vmem:[%s453] sm:$0x3] %v452
          %s455 = sadd.s32 %s394, 1
          %s456 = ssub.s32 6, %s394
          %s457 = scalar_select %p387, %s456, %s455
          %s458 = smul.u32 %s457, 2
          %v459 = vstv %s457
          %vm460 = vcmp.lt.s32.totalorder %v459, %v386
          %v461 = vsel %vm460, 1, 0
          %v462 = vcvt.s32.f32 %v461
          %v463 = vld [vmem:[#allocation3] sm:$0x3]
          %s464 = scalar_lea.vmem [#allocation2], %s458
          %v465 = vld [vmem:[%s464] sm:$0x3]
          %v466 = vld [vmem:[%s259] sm:$0xff]
          %v467 = vld [vmem:[%s259 + $0x8] sm:$0xff]
          %v468 = vld [vmem:[%s259 + $0x10] sm:$0xff]
          %v469 = vld [vmem:[%s259 + $0x18] sm:$0xff]
          %v470 = vld [vmem:[%s259 + $0x20] sm:$0xff]
          %v471 = vld [vmem:[%s259 + $0x28] sm:$0xff]
          %v472 = vld [vmem:[%s259 + $0x30] sm:$0xff]
          %v473 = vld [vmem:[%s259 + $0x38] sm:$0xff]
          %v474 = vld [vmem:[%s259 + $0x40] sm:$0xff]
          %v475 = vld [vmem:[%s259 + $0x48] sm:$0xff]
          %v476 = vld [vmem:[%s259 + $0x50] sm:$0xff]
          %v477 = vld [vmem:[%s259 + $0x58] sm:$0xff]
          %v478 = vld [vmem:[%s259 + $0x60] sm:$0xff]
          %v479 = vld [vmem:[%s259 + $0x68] sm:$0xff]
          %v480 = vld [vmem:[%s259 + $0x70] sm:$0xff]
          %v481 = vld [vmem:[%s259 + $0x78] sm:$0xff]
          %482 = vmatpush.msra.mxu0 %v481
          %483 = vmatpush.msra.mxu0 %v480
          %484 = vmatpush.msra.mxu0 %v479
          %485 = vmatpush.msra.mxu0 %v478
          %486 = vmatpush.msra.mxu0 %v477
          %487 = vmatpush.msra.mxu0 %v476
          %488 = vmatpush.msra.mxu0 %v475
          %489 = vmatpush.msra.mxu0 %v474
          %490 = vmatpush.msra.mxu0 %v473
          %491 = vmatpush.msra.mxu0 %v472
          %492 = vmatpush.msra.mxu0 %v471
          %493 = vmatpush.msra.mxu0 %v470
          %494 = vmatpush.msra.mxu0 %v469
          %495 = vmatpush.msra.mxu0 %v468
          %496 = vmatpush.msra.mxu0 %v467
          %497 = vmatpush.msra.mxu0 %v466
          %498 = vmatmul.f32.gmra.mxu0 %v463
          %v499 = vpop.f32.mrf.mxu0
          %v500 = vadd.f32 0.0, %v499
          %501 = vdwg.mxu0
          %v502 = vadd.f32 %v465, %v500
          %v503 = vtanh.pop %v502
          %v504 = vsub.f32 %v503, %v463
          %506 = vset.pattern.permute.xlu0 0
          %507 = vperm.xlu0 %506, %v462
          %v508 = vpop.permute.xlu0 %507
          %v510 = vmul.f32 %v508, %v504
          %v511 = vadd.f32 %v463, %v510
          %512 = vst [vmem:[#allocation3] sm:$0x3] %v511
          %v513 = vmul.f32 %v511, %v508
          %s514 = scalar_lea.vmem %s293, %s458 [#allocation8]
          %515 = vst [vmem:[%s514] sm:$0x3] %v513
          %s516 = sadd.s32 %s394, 2
          %s517 = ssub.s32 5, %s394
          %s518 = scalar_select %p387, %s517, %s516
          %s519 = smul.u32 %s518, 2
          %v520 = vstv %s518
          %vm521 = vcmp.lt.s32.totalorder %v520, %v386
          %v522 = vsel %vm521, 1, 0
          %v523 = vcvt.s32.f32 %v522
          %v524 = vld [vmem:[#allocation3] sm:$0x3]
          %s525 = scalar_lea.vmem [#allocation2], %s519
          %v526 = vld [vmem:[%s525] sm:$0x3]
          %v527 = vld [vmem:[%s259] sm:$0xff]
          %v528 = vld [vmem:[%s259 + $0x8] sm:$0xff]
          %v529 = vld [vmem:[%s259 + $0x10] sm:$0xff]
          %v530 = vld [vmem:[%s259 + $0x18] sm:$0xff]
          %v531 = vld [vmem:[%s259 + $0x20] sm:$0xff]
          %v532 = vld [vmem:[%s259 + $0x28] sm:$0xff]
          %v533 = vld [vmem:[%s259 + $0x30] sm:$0xff]
          %v534 = vld [vmem:[%s259 + $0x38] sm:$0xff]
          %v535 = vld [vmem:[%s259 + $0x40] sm:$0xff]
          %v536 = vld [vmem:[%s259 + $0x48] sm:$0xff]
          %v537 = vld [vmem:[%s259 + $0x50] sm:$0xff]
          %v538 = vld [vmem:[%s259 + $0x58] sm:$0xff]
          %v539 = vld [vmem:[%s259 + $0x60] sm:$0xff]
          %v540 = vld [vmem:[%s259 + $0x68] sm:$0xff]
          %v541 = vld [vmem:[%s259 + $0x70] sm:$0xff]
          %v542 = vld [vmem:[%s259 + $0x78] sm:$0xff]
          %543 = vmatpush.msra.mxu0 %v542
          %544 = vmatpush.msra.mxu0 %v541
          %545 = vmatpush.msra.mxu0 %v540
          %546 = vmatpush.msra.mxu0 %v539
          %547 = vmatpush.msra.mxu0 %v538
          %548 = vmatpush.msra.mxu0 %v537
          %549 = vmatpush.msra.mxu0 %v536
          %550 = vmatpush.msra.mxu0 %v535
          %551 = vmatpush.msra.mxu0 %v534
          %552 = vmatpush.msra.mxu0 %v533
          %553 = vmatpush.msra.mxu0 %v532
          %554 = vmatpush.msra.mxu0 %v531
          %555 = vmatpush.msra.mxu0 %v530
          %556 = vmatpush.msra.mxu0 %v529
          %557 = vmatpush.msra.mxu0 %v528
          %558 = vmatpush.msra.mxu0 %v527
          %559 = vmatmul.f32.gmra.mxu0 %v524
          %v560 = vpop.f32.mrf.mxu0
          %v561 = vadd.f32 0.0, %v560
          %562 = vdwg.mxu0
          %v563 = vadd.f32 %v526, %v561
          %v564 = vtanh.pop %v563
          %v565 = vsub.f32 %v564, %v524
          %567 = vset.pattern.permute.xlu0 0
          %568 = vperm.xlu0 %567, %v523
          %v569 = vpop.permute.xlu0 %568
          %v571 = vmul.f32 %v569, %v565
          %v572 = vadd.f32 %v524, %v571
          %573 = vst [vmem:[#allocation3] sm:$0x3] %v572
          %v574 = vmul.f32 %v572, %v569
          %s575 = scalar_lea.vmem %s293, %s519 [#allocation8]
          %576 = vst [vmem:[%s575] sm:$0x3] %v574
          %s577 = sadd.s32 %s394, 3
          %s578 = ssub.s32 4, %s394
          %s579 = scalar_select %p387, %s578, %s577
          %s580 = smul.u32 %s579, 2
          %v581 = vstv %s579
          %vm582 = vcmp.lt.s32.totalorder %v581, %v386
          %v583 = vsel %vm582, 1, 0
          %v584 = vcvt.s32.f32 %v583
          %v585 = vld [vmem:[#allocation3] sm:$0x3]
          %s586 = scalar_lea.vmem [#allocation2], %s580
          %v587 = vld [vmem:[%s586] sm:$0x3]
          %v588 = vld [vmem:[%s259] sm:$0xff]
          %v589 = vld [vmem:[%s259 + $0x8] sm:$0xff]
          %v590 = vld [vmem:[%s259 + $0x10] sm:$0xff]
          %v591 = vld [vmem:[%s259 + $0x18] sm:$0xff]
          %v592 = vld [vmem:[%s259 + $0x20] sm:$0xff]
          %v593 = vld [vmem:[%s259 + $0x28] sm:$0xff]
          %v594 = vld [vmem:[%s259 + $0x30] sm:$0xff]
          %v595 = vld [vmem:[%s259 + $0x38] sm:$0xff]
          %v596 = vld [vmem:[%s259 + $0x40] sm:$0xff]
          %v597 = vld [vmem:[%s259 + $0x48] sm:$0xff]
          %v598 = vld [vmem:[%s259 + $0x50] sm:$0xff]
          %v599 = vld [vmem:[%s259 + $0x58] sm:$0xff]
          %v600 = vld [vmem:[%s259 + $0x60] sm:$0xff]
          %v601 = vld [vmem:[%s259 + $0x68] sm:$0xff]
          %v602 = vld [vmem:[%s259 + $0x70] sm:$0xff]
          %v603 = vld [vmem:[%s259 + $0x78] sm:$0xff]
          %604 = vmatpush.msra.mxu0 %v603
          %605 = vmatpush.msra.mxu0 %v602
          %606 = vmatpush.msra.mxu0 %v601
          %607 = vmatpush.msra.mxu0 %v600
          %608 = vmatpush.msra.mxu0 %v599
          %609 = vmatpush.msra.mxu0 %v598
          %610 = vmatpush.msra.mxu0 %v597
          %611 = vmatpush.msra.mxu0 %v596
          %612 = vmatpush.msra.mxu0 %v595
          %613 = vmatpush.msra.mxu0 %v594
          %614 = vmatpush.msra.mxu0 %v593
          %615 = vmatpush.msra.mxu0 %v592
          %616 = vmatpush.msra.mxu0 %v591
          %617 = vmatpush.msra.mxu0 %v590
          %618 = vmatpush.msra.mxu0 %v589
          %619 = vmatpush.msra.mxu0 %v588
          %620 = vmatmul.f32.gmra.mxu0 %v585
          %v621 = vpop.f32.mrf.mxu0
          %v622 = vadd.f32 0.0, %v621
          %623 = vdwg.mxu0
          %v624 = vadd.f32 %v587, %v622
          %v625 = vtanh.pop %v624
          %v626 = vsub.f32 %v625, %v585
          %628 = vset.pattern.permute.xlu0 0
          %629 = vperm.xlu0 %628, %v584
          %v630 = vpop.permute.xlu0 %629
          %v632 = vmul.f32 %v630, %v626
          %v633 = vadd.f32 %v585, %v632
          %634 = vst [vmem:[#allocation3] sm:$0x3] %v633
          %v635 = vmul.f32 %v633, %v630
          %s636 = scalar_lea.vmem %s293, %s580 [#allocation8]
          %637 = vst [vmem:[%s636] sm:$0x3] %v635
        $region53: #{wav2edge_forward.4} parent=39 // loop_footer
          %s393 = sadd.s32 1, %s389
        $region54: #{wav2edge_forward.4} parent=39 // loop_footer_branch
          %388 = sbr.rel target = $region50
        $region55: #{wav2edge_forward.4} parent=39 // loop_exit
          _
        %s638 = sand.u32 %s150, 1
        %s639 = sand.u32 %s150, 1
        %s640 = smul.addr %s639, 16
        %s641 = scalar_lea.vmem [#allocation8], %s640
        // Predicated region
        $region56: #{wav2edge_forward.4} parent=39 // pred_check
          %p642 = pneg %p160
        $region57: #{wav2edge_forward.4} parent=39 // pred_check_branch
          %644 = sbr.rel (%p642) target = $region59
        $region58: #{wav2edge_forward.4} parent=39 // pred_region
          %s645 = smul.addr %s22, 8
          %s646 = scalar_lea.vmem %s5, %s645
          // Predicated region
          $region60: #{wav2edge_forward.4} parent=58 // pred_check
            _
          $region61: #{wav2edge_forward.4} parent=58 // pred_check_branch
            %648 = sbr.rel (0) target = $region63
          $region62: #{wav2edge_forward.4} parent=58 // pred_region
            // Predicated region
            $region64: #{wav2edge_forward.4} parent=62 // pred_check
              _
            $region65: #{wav2edge_forward.4} parent=62 // pred_check_branch
              %650 = sbr.rel (0) target = $region67
            $region66: #{wav2edge_forward.4} parent=62 // pred_region
              // Predicated region
              $region79: #{wav2edge_forward.4} parent=66 // pred_check
                _
              $region80: #{wav2edge_forward.4} parent=66 // pred_check_branch
                %668 = sbr.rel (0) target = $region82
              $region81: #{wav2edge_forward.4} parent=66 // pred_region
                loop: start=0, step=1, limit=1
                $region83: #{wav2edge_forward.4} parent=81 // loop_pre_header
                  _
                $region84: #{wav2edge_forward.4} parent=81 // loop_header
                  %s670 = sphi 0, %s674
                  %p671 = scmp.ge.s32.totalorder %s670, 1
                  %s675 = sphi %s641, %s641
                  %s676 = sphi %s646, %s646
                $region85: #{wav2edge_forward.4} parent=81 // loop_header_branch
                  %673 = sbr.rel (%p671) target = $region89
                $region86: #{wav2edge_forward.4} parent=81 // loop_body
                  %v677 = vld [vmem:[%s675] sm:$0xff]
                  %678 = vst [vmem:[%s676] sm:$0xff] %v677
                  %v679 = vld [vmem:[%s675 + $0x8] sm:$0xff]
                  %680 = vst [vmem:[%s676 + $0x10] sm:$0xff] %v679
                $region87: #{wav2edge_forward.4} parent=81 // loop_footer
                  %s674 = sadd.s32 1, %s670
                $region88: #{wav2edge_forward.4} parent=81 // loop_footer_branch
                  %669 = sbr.rel target = $region84
                $region89: #{wav2edge_forward.4} parent=81 // loop_exit
                  _
              $region82: #{wav2edge_forward.4} parent=66 // pred_fallthru
                _
              // Predicated region
              $region90: #{wav2edge_forward.4} parent=66 // pred_check
                _
              $region91: #{wav2edge_forward.4} parent=66 // pred_check_branch
                %682 = sbr.rel target = $region93
              $region92: #{wav2edge_forward.4} parent=66 // pred_region
                _
              $region93: #{wav2edge_forward.4} parent=66 // pred_fallthru
                _
            $region67: #{wav2edge_forward.4} parent=62 // pred_fallthru
              _
            // Predicated region
            $region68: #{wav2edge_forward.4} parent=62 // pred_check
              _
            $region69: #{wav2edge_forward.4} parent=62 // pred_check_branch
              %652 = sbr.rel target = $region71
            $region70: #{wav2edge_forward.4} parent=62 // pred_region
              %s654 = ssub.s32 256, 1
              loop: start=0, step=1, limit=1
              $region72: #{wav2edge_forward.4} parent=70 // loop_pre_header
                _
              $region73: #{wav2edge_forward.4} parent=70 // loop_header
                %s656 = sphi 0, %s660
                %p657 = scmp.ge.s32.totalorder %s656, 1
                %s661 = sphi %s641, %s641
                %s662 = sphi %s646, %s646
              $region74: #{wav2edge_forward.4} parent=70 // loop_header_branch
                %659 = sbr.rel (%p657) target = $region78
              $region75: #{wav2edge_forward.4} parent=70 // loop_body
                %v663 = vld [vmem:[%s661] sm:%s654]
                %664 = vst [vmem:[%s662] sm:%s654] %v663
                %v665 = vld [vmem:[%s661 + $0x8] sm:%s654]
                %666 = vst [vmem:[%s662 + $0x10] sm:%s654] %v665
              $region76: #{wav2edge_forward.4} parent=70 // loop_footer
                %s660 = sadd.s32 1, %s656
              $region77: #{wav2edge_forward.4} parent=70 // loop_footer_branch
                %655 = sbr.rel target = $region73
              $region78: #{wav2edge_forward.4} parent=70 // loop_exit
                _
            $region71: #{wav2edge_forward.4} parent=62 // pred_fallthru
              _
          $region63: #{wav2edge_forward.4} parent=58 // pred_fallthru
            _
          %683 = vnop
        $region59: #{wav2edge_forward.4} parent=39 // pred_fallthru
          _
      $region40: #{wav2edge_forward.4} parent=5 // pred_fallthru
        _
      %p684 = scmp.le.s32.totalorder 2, %s17
      // Predicated region
      $region94: #{wav2edge_forward.4} parent=5 // pred_check
        %p685 = pneg %p684
      $region95: #{wav2edge_forward.4} parent=5 // pred_check_branch
        %687 = sbr.rel (%p685) target = $region97
      $region96: #{wav2edge_forward.4} parent=5 // pred_region
        %s688 = ssub.s32 %s17, 2
        // Predicated region
        $region98: #{wav2edge_forward.4} parent=96 // pred_check
          %p689 = pneg %p166
        $region99: #{wav2edge_forward.4} parent=96 // pred_check_branch
          %691 = sbr.rel (%p689) target = $region101
        $region100: #{wav2edge_forward.4} parent=96 // pred_region
          %s692 = sand.u32 %s151, 1
          %s693 = sand.u32 %s151, 1
          %s694 = smul.addr %s693, 16
          %s695 = scalar_lea.vmem [#allocation8], %s694
        $region101: #{wav2edge_forward.4} parent=96 // pred_fallthru
          _
      $region97: #{wav2edge_forward.4} parent=5 // pred_fallthru
        _
    $region6: #{wav2edge_forward.4} parent=1 // loop_footer
      %s21 = sadd.s32 1, %s17
    $region7: #{wav2edge_forward.4} parent=1 // loop_footer_branch
      %16 = sbr.rel target = $region3
    $region8: #{wav2edge_forward.4} parent=1 // loop_exit
      _
    %696 = vsyncpa [#allocation5], 1
    %s697 = scalar_lea.sflag [#allocation5], 1
    %698 = vsyncpa %s697, 1
    %699 = vsyncpa [#allocation7], 1
    %s700 = scalar_lea.sflag [#allocation7], 1
    %701 = vsyncpa %s700, 1

</llo_original>
